<compile_context>
chip_gen: v7x
topology: tpu7x:2x2x1
jax: 0.10.0
libtpu: 0.0.40
codegen_flags: <defaults>
</compile_context>

<pallas_src>
import functools

import jax
import jax.numpy as jnp
from jax.experimental import pallas as pl
from jax.experimental.pallas import tpu as pltpu


def _round_up(x, m):
    return (x + m - 1) // m * m


# ----------------------------------------------------------------------------
# Pallas kernel bodies
# ----------------------------------------------------------------------------
def _linear_kernel(x_ref, w_ref, b_ref, o_ref, *, relu):
    """One M-tile of (x @ w) + b [+ ReLU]; bf16 operands, f32 MXU accumulation."""
    acc = jnp.dot(x_ref[...], w_ref[...], preferred_element_type=jnp.float32)
    acc = acc + b_ref[...]
    if relu:
        acc = jnp.maximum(acc, 0.0)
    o_ref[...] = acc.astype(o_ref.dtype)


def _encoder_kernel(x_ref, w1_ref, b1_ref, w2_ref, b2_ref, w3_ref, b3_ref,
                    o_ref, xpad1, xpad2, *, W, H, cin, hid):
    """Fused encoder stand-in for one batch element, fully in VMEM.

    conv3x3(Cin->hid)+ReLU -> conv3x3(hid->hid)+ReLU -> conv1x1(hid->1 class).

    Activations are 2-D (W, H*C) tiles (time on sublanes, height*channels on
    lanes).  A 3x3 'same' conv = 3 shifted-slice matmuls along the W axis
    against block-banded weights that already encode the H-direction taps and
    zero padding -> no im2col, no in-kernel reshape/transpose.  conv3 is a
    block-diagonal matmul epilogue (fused, no separate launch).
    """
    HCin = H * cin
    HF = H * hid

    # ---- conv1: 3x3, Cin -> hid ---------------------------------------------
    xpad1[0:1, :] = jnp.zeros((1, HCin), jnp.float32)          # W-pad rows
    xpad1[W + 1:W + 2, :] = jnp.zeros((1, HCin), jnp.float32)
    xpad1[1:W + 1, :] = x_ref[0].astype(jnp.float32)
    acc = jnp.zeros((W, HF), jnp.float32)
    for dw in range(3):                                        # static unroll
        acc = acc + jnp.dot(xpad1[dw:dw + W, :].astype(jnp.bfloat16),
                            w1_ref[dw], preferred_element_type=jnp.float32)
    y1 = jnp.maximum(acc + b1_ref[...], 0.0)                   # (W, H*hid) f32

    # ---- conv2: 3x3, hid -> hid ---------------------------------------------
    xpad2[0:1, :] = jnp.zeros((1, HF), jnp.float32)
    xpad2[W + 1:W + 2, :] = jnp.zeros((1, HF), jnp.float32)
    xpad2[1:W + 1, :] = y1
    acc = jnp.zeros((W, HF), jnp.float32)
    for dw in range(3):
        acc = acc + jnp.dot(xpad2[dw:dw + W, :].astype(jnp.bfloat16),
                            w2_ref[dw], preferred_element_type=jnp.float32)
    y2 = jnp.maximum(acc + b2_ref[...], 0.0)                   # (W, H*hid) f32

    # ---- conv3: 1x1, hid -> 1 class (fused epilogue) --------------------------
    enc = jnp.dot(y2.astype(jnp.bfloat16), w3_ref[...],
                  preferred_element_type=jnp.float32) + b3_ref[...]
    o_ref[0] = enc                                             # (W, H) f32


def _decoder_kernel(x1_ref, x2_ref, wt_ref, wb_ref, b_ref, o_ref, *, W):
    """Fused cat/diff/decode for BOTH heads; writes the final concatenated logits.

    logits[:W] = x1 @ Wtop + (x1 - x2) @ Wbot + b
    logits[W:] = x2 @ Wtop + (x2 - x1) @ Wbot + b
    """
    a = x1_ref[0]                                              # (W, H) f32
    c = x2_ref[0]
    wt = wt_ref[...]
    wb = wb_ref[...]
    bias = b_ref[...]
    l1 = (jnp.dot(a.astype(jnp.bfloat16), wt, preferred_element_type=jnp.float32)
          + jnp.dot((a - c).astype(jnp.bfloat16), wb,
                    preferred_element_type=jnp.float32) + bias)
    l2 = (jnp.dot(c.astype(jnp.bfloat16), wt, preferred_element_type=jnp.float32)
          + jnp.dot((c - a).astype(jnp.bfloat16), wb,
                    preferred_element_type=jnp.float32) + bias)
    o_ref[0, :W, :] = l1
    o_ref[0, W:, :] = l2


# ----------------------------------------------------------------------------
# pallas_call wrappers
# ----------------------------------------------------------------------------
_VMEM_LIMIT = 32 * 1024 * 1024


def pallas_linear(x, w, b, *, relu=False, out_dtype=jnp.float32, tm=512):
    """Tiled (M-grid) fused matmul + bias [+ ReLU]; weights pinned across tiles."""
    M, K = x.shape
    K2, N = w.shape
    assert K == K2
    Mp = _round_up(max(M, 8), 8)
    tm = min(tm, Mp)
    Mp = _round_up(Mp, tm)
    if Mp != M:
        x = jnp.pad(x, ((0, Mp - M), (0, 0)))
    out = pl.pallas_call(
        functools.partial(_linear_kernel, relu=relu),
        out_shape=jax.ShapeDtypeStruct((Mp, N), out_dtype),
        grid=(Mp // tm,),
        in_specs=[pl.BlockSpec((tm, K), lambda i: (i, 0)),
                  pl.BlockSpec((K, N), lambda i: (0, 0)),
                  pl.BlockSpec((1, N), lambda i: (0, 0))],
        out_specs=pl.BlockSpec((tm, N), lambda i: (i, 0)),
        compiler_params=pltpu.CompilerParams(
            dimension_semantics=("parallel",),
            vmem_limit_bytes=_VMEM_LIMIT),
    )(x.astype(jnp.bfloat16), w.astype(jnp.bfloat16),
      b.reshape(1, N).astype(jnp.float32))
    return out[:M] if Mp != M else out


def encoder_forward(feat, p, cfg):
    """(Bs, W, H*Cin) bf16 -> (Bs, W, H) f32, one fused conv kernel per batch row."""
    Bs, W, HCin = feat.shape
    H, cin, hid = cfg["height"], cfg["in_ch"], cfg["hid"]
    HF = H * hid
    kernel = functools.partial(_encoder_kernel, W=W, H=H, cin=cin, hid=hid)
    return pl.pallas_call(
        kernel,
        out_shape=jax.ShapeDtypeStruct((Bs, W, H), jnp.float32),
        grid=(Bs,),
        in_specs=[
            pl.BlockSpec((1, W, HCin), lambda i: (i, 0, 0)),   # activations
            pl.BlockSpec((3, HCin, HF), lambda i: (0, 0, 0)),  # banded conv1 W
            pl.BlockSpec((1, HF), lambda i: (0, 0)),           # conv1 bias (tiled)
            pl.BlockSpec((3, HF, HF), lambda i: (0, 0, 0)),    # banded conv2 W
            pl.BlockSpec((1, HF), lambda i: (0, 0)),           # conv2 bias (tiled)
            pl.BlockSpec((HF, H), lambda i: (0, 0)),           # block-diag conv3 W
            pl.BlockSpec((1, H), lambda i: (0, 0)),            # conv3 bias (tiled)
        ],
        out_specs=pl.BlockSpec((1, W, H), lambda i: (i, 0, 0)),
        scratch_shapes=[pltpu.VMEM((W + 2, HCin), jnp.float32),
                        pltpu.VMEM((W + 2, HF), jnp.float32)],
        compiler_params=pltpu.CompilerParams(
            dimension_semantics=("parallel",),
            vmem_limit_bytes=_VMEM_LIMIT),
    )(feat, p["Wband1"], p["b1_t"], p["Wband2"], p["b2_t"], p["W3band"], p["b3_t"])


def decoder_forward(x1e, x2e, p, cfg):
    """Fused decoder for both heads: (B, W, H) x2 -> (B, 2W, n_classes)."""
    B, W, H = x1e.shape
    C = cfg["n_classes"]
    kernel = functools.partial(_decoder_kernel, W=W)
    return pl.pallas_call(
        kernel,
        out_shape=jax.ShapeDtypeStruct((B, 2 * W, C), jnp.float32),
        grid=(B,),
        in_specs=[pl.BlockSpec((1, W, H), lambda i: (i, 0, 0)),
                  pl.BlockSpec((1, W, H), lambda i: (i, 0, 0)),
                  pl.BlockSpec((H, C), lambda i: (0, 0)),
                  pl.BlockSpec((H, C), lambda i: (0, 0)),
                  pl.BlockSpec((1, C), lambda i: (0, 0))],
        out_specs=pl.BlockSpec((1, 2 * W, C), lambda i: (i, 0, 0)),
        compiler_params=pltpu.CompilerParams(
            dimension_semantics=("parallel",),
            vmem_limit_bytes=_VMEM_LIMIT),
    )(x1e, x2e, p["W_dec_top"], p["W_dec_bot"], p["b_dec"])


# ----------------------------------------------------------------------------
# Plain-JAX glue (data movement only; no transposes anywhere)
# ----------------------------------------------------------------------------
def im2col_1d(x, ks, stride):
    """x:(B,C,T) -> (B*T_out, C*ks) patches, 'same'-style pad of ks//2."""
    B, C, T = x.shape
    pad = ks // 2
    xp = jnp.pad(x, ((0, 0), (0, 0), (pad, pad)))
    T_out = (T + 2 * pad - ks) // stride + 1
    idx = jnp.arange(T_out)[:, None] * stride + jnp.arange(ks)[None, :]
    patches = xp[:, :, idx]                      # (B, C, T_out, ks)
    patches = patches.transpose(0, 2, 1, 3)      # (B, T_out, C, ks) -- tiny gather glue
    return patches.reshape(B * T_out, C * ks), T_out


def feature_extractor_forward(xs, params, cfg):
    """(Bs, C, T) -> (Bs, T_out, height*in_ch) bf16, time-major channels-last."""
    Bs = xs.shape[0]
    patches, T_out = im2col_1d(xs, cfg["ks"], cfg["stride"])
    feat = pallas_linear(patches, params["W_fe"], params["b_fe"],
                         relu=True, out_dtype=jnp.bfloat16)
    return feat.reshape(Bs, T_out, cfg["height"] * cfg["in_ch"])


def spec2dcnn_2day_v2_forward(x, params, cfg):
    """Forward pass matching Spec2DCNN2DayV2.forward (labels=None path)."""
    B, C, T = x.shape
    half = T // 2
    # stack the two day-halves along batch so FE + encoder run once (shared weights)
    xs = jnp.concatenate([x[:, :, :half], x[:, :, half:]], axis=0)   # (2B, C, half)

    feat = feature_extractor_forward(xs, params, cfg)                # (2B, W, H*Cin) bf16
    enc = encoder_forward(feat, params, cfg)                         # (2B, W, H) f32
    x1e, x2e = enc[:B], enc[B:]

    logits = decoder_forward(x1e, x2e, params, cfg)                  # (B, 2W, n_classes)
    return {"logits": logits}


# ----------------------------------------------------------------------------
# Parameters: natural conv weights + one-time packing into banded/fused form
# ----------------------------------------------------------------------------
def init_raw_params(key, cfg, n_channels):
    H, Cin, hid, NC, ks = (cfg["height"], cfg["in_ch"], cfg["hid"],
                           cfg["n_classes"], cfg["ks"])
    keys = jax.random.split(key, 10)

    def w(k, shape, fan_in):
        return jax.random.normal(k, shape, jnp.float32) / jnp.sqrt(fan_in)

    return {
        "W_fe": w(keys[0], (n_channels * ks, H * Cin), n_channels * ks),
        "b_fe": 0.1 * jax.random.normal(keys[1], (H * Cin,), jnp.float32),
        "K1": w(keys[2], (3, 3, Cin, hid), 9 * Cin),
        "b1": 0.1 * jax.random.normal(keys[3], (hid,), jnp.float32),
        "K2": w(keys[4], (3, 3, hid, hid), 9 * hid),
        "b2": 0.1 * jax.random.normal(keys[5], (hid,), jnp.float32),
        "w3": w(keys[6], (hid,), hid),
        "b3": 0.1 * jax.random.normal(keys[7], (), jnp.float32),
        "W_dec": w(keys[8], (2 * H, NC), 2 * H),
        "b_dec": 0.1 * jax.random.normal(keys[9], (NC,), jnp.float32),
    }


def prepare_params(raw, cfg):
    """Pack natural conv weights into banded/block-diagonal matmul form (bf16)."""
    H, hid, NC = cfg["height"], cfg["hid"], cfg["n_classes"]

    def band_h(K_dw):
        # K_dw: (3, C, F) taps along H for one W-shift -> (H*C, H*F) banded matrix
        C, F = K_dw.shape[1], K_dw.shape[2]
        Wb = jnp.zeros((H * C, H * F), jnp.float32)
        for h in range(H):
            for dh in range(3):
                p = h + dh - 1
                if 0 <= p < H:
                    Wb = Wb.at[p * C:(p + 1) * C, h * F:(h + 1) * F].set(K_dw[dh])
        return Wb

    def band3x3(K):
        return jnp.stack([band_h(K[dw]) for dw in range(3)], axis=0)

    W3band = jnp.zeros((H * hid, H), jnp.float32)
    for h in range(H):
        W3band = W3band.at[h * hid:(h + 1) * hid, h].set(raw["w3"])

    return {
        "W_fe": raw["W_fe"].astype(jnp.bfloat16),
        "b_fe": raw["b_fe"],
        "Wband1": band3x3(raw["K1"]).astype(jnp.bfloat16),
        "b1_t": jnp.tile(raw["b1"], H).reshape(1, H * hid),
        "Wband2": band3x3(raw["K2"]).astype(jnp.bfloat16),
        "b2_t": jnp.tile(raw["b2"], H).reshape(1, H * hid),
        "W3band": W3band.astype(jnp.bfloat16),
        "b3_t": jnp.full((1, H), raw["b3"], jnp.float32),
        "W_dec_top": raw["W_dec"][:H].astype(jnp.bfloat16),
        "W_dec_bot": raw["W_dec"][H:].astype(jnp.bfloat16),
        "b_dec": raw["b_dec"].reshape(1, NC),
    }


# ----------------------------------------------------------------------------
# Pure-JAX reference (matched bf16 rounding points) for a correctness check
# ----------------------------------------------------------------------------
def _conv3x3_ref(z, K, b):
    Bz, Wz, Hz, Cz = z.shape
    F = K.shape[-1]
    Kb = K.astype(jnp.bfloat16).astype(jnp.float32)
    zp = jnp.pad(z, ((0, 0), (1, 1), (1, 1), (0, 0)))
    acc = jnp.zeros((Bz, Wz, Hz, F), jnp.float32)
    for dw in range(3):
        for dh in range(3):
            acc = acc + jnp.einsum("bwhc,cf->bwhf",
                                   zp[:, dw:dw + Wz, dh:dh + Hz, :], Kb[dw, dh])
    return jnp.maximum(acc + b, 0.0)


def reference_forward(x, raw, cfg):
    B, _, T = x.shape
    half = T // 2
    H, Cin = cfg["height"], cfg["in_ch"]
    ks, stride = cfg["ks"], cfg["stride"]

    def fe(xh):
        patches, T_out = im2col_1d(xh, ks, stride)
        f = jnp.dot(patches.astype(jnp.bfloat16), raw["W_fe"].astype(jnp.bfloat16),
                    preferred_element_type=jnp.float32)
        f = jnp.maximum(f + raw["b_fe"], 0.0)
        f = f.astype(jnp.bfloat16).astype(jnp.float32)
        return f.reshape(xh.shape[0], T_out, H, Cin)

    def enc(z):
        y1 = _conv3x3_ref(z, raw["K1"], raw["b1"]).astype(jnp.bfloat16).astype(jnp.float32)
        y2 = _conv3x3_ref(y1, raw["K2"], raw["b2"]).astype(jnp.bfloat16).astype(jnp.float32)
        w3 = raw["w3"].astype(jnp.bfloat16).astype(jnp.float32)
        return jnp.einsum("bwhc,c->bwh", y2, w3) + raw["b3"]

    e1 = enc(fe(x[:, :, :half]))
    e2 = enc(fe(x[:, :, half:]))
    Wtop = raw["W_dec"][:H].astype(jnp.bfloat16)
    Wbot = raw["W_dec"][H:].astype(jnp.bfloat16)

    def dec(ea, eb):
        return (jnp.einsum("bwh,hc->bwc", ea.astype(jnp.bfloat16), Wtop,
                           preferred_element_type=jnp.float32)
                + jnp.einsum("bwh,hc->bwc", (ea - eb).astype(jnp.bfloat16), Wbot,
                             preferred_element_type=jnp.float32)
                + raw["b_dec"])

    return jnp.concatenate([dec(e1, e2), dec(e2, e1)], axis=1)


# ----------------------------------------------------------------------------
# Main
# ----------------------------------------------------------------------------
if __name__ == "__main__":
    cfg = dict(in_ch=4, height=8, hid=16, n_classes=3, ks=3, stride=4)
    batch, n_channels, duration = 2, 4, 64

    key = jax.random.PRNGKey(0)
    k_x, k_p = jax.random.split(key)
    x = jax.random.normal(k_x, (batch, n_channels, duration), jnp.float32)

    raw = init_raw_params(k_p, cfg, n_channels)
    params = prepare_params(raw, cfg)

    fwd = jax.jit(functools.partial(spec2dcnn_2day_v2_forward, cfg=cfg))
    out = fwd(x, params)
    logits = jax.block_until_ready(out["logits"])

    half = duration // 2
    t_out = (half + 2 * (cfg["ks"] // 2) - cfg["ks"]) // cfg["stride"] + 1
    assert logits.shape == (batch, 2 * t_out, cfg["n_classes"]), logits.shape
    assert bool(jnp.all(jnp.isfinite(logits)))

    ref = reference_forward(x, raw, cfg)
    max_err = float(jnp.max(jnp.abs(logits - ref)))
    assert max_err < 5e-2, f"max abs error vs reference: {max_err}"

    print("KERNEL_OK")
</pallas_src>

<mosaic_0001>
module attributes {stable_mosaic.version = 11 : i64} {
  func.func @_linear_kernel(%arg0: i32, %arg1: memref<32x12xbf16, #tpu.memory_space<vmem>>, %arg2: memref<12x32xbf16, #tpu.memory_space<vmem>>, %arg3: memref<1x32xf32, #tpu.memory_space<vmem>>, %arg4: memref<32x32xbf16, #tpu.memory_space<vmem>>) attributes {dimension_semantics = [#tpu.dimension_semantics<parallel>], iteration_bounds = array<i64: 1>, scalar_prefetch = 0 : i64, scratch_operands = 0 : i64, tpu.core_type = #tpu.core_type<tc>, window_params = [{transform_indices = @transform_0, window_bounds = array<i64: 32, 12>}, {pipeline_mode = #tpu.pipeline_mode<synchronous>, transform_indices = @transform_1, window_bounds = array<i64: 12, 32>}, {pipeline_mode = #tpu.pipeline_mode<synchronous>, transform_indices = @transform_2, window_bounds = array<i64: 1, 32>}, {transform_indices = @transform_3, window_bounds = array<i64: 32, 32>}]} {
    %c0 = arith.constant 0 : index
    %c0_0 = arith.constant 0 : index
    %0 = vector.load %arg1[%c0, %c0_0] : memref<32x12xbf16, #tpu.memory_space<vmem>>, vector<32x12xbf16>
    %c0_1 = arith.constant 0 : index
    %c0_2 = arith.constant 0 : index
    %1 = vector.load %arg2[%c0_1, %c0_2] : memref<12x32xbf16, #tpu.memory_space<vmem>>, vector<12x32xbf16>
    %cst = arith.constant dense<0.000000e+00> : vector<32x32xf32>
    %2 = tpu.matmul %0, %1, %cst {dimension_numbers = #tpu.dot_dimension_numbers<[1], [0], [0], [1], [0, 0, 1, 1], [], []>} : vector<32x12xbf16>, vector<12x32xbf16>, vector<32x32xf32> -> vector<32x32xf32>
    %c0_3 = arith.constant 0 : index
    %c0_4 = arith.constant 0 : index
    %3 = vector.load %arg3[%c0_3, %c0_4] : memref<1x32xf32, #tpu.memory_space<vmem>>, vector<1x32xf32>
    %4 = vector.broadcast %3 : vector<1x32xf32> to vector<32x32xf32>
    %5 = arith.addf %2, %4 : vector<32x32xf32>
    %cst_5 = arith.constant 0.000000e+00 : f32
    %6 = vector.broadcast %cst_5 : f32 to vector<32x32xf32>
    %7 = arith.maximumf %5, %6 : vector<32x32xf32>
    %8 = arith.truncf %7 : vector<32x32xf32> to vector<32x32xbf16>
    %c0_6 = arith.constant 0 : index
    %c0_7 = arith.constant 0 : index
    %9 = vector.load %arg4[%c0_6, %c0_7] : memref<32x32xbf16, #tpu.memory_space<vmem>>, vector<32x32xbf16>
    tpu.vector_store %arg4[%c0_6, %c0_7], %8 {strides = array<i32>} : memref<32x32xbf16, #tpu.memory_space<vmem>>, vector<32x32xbf16>,
    return
  }
  func.func @transform_0(%arg0: i32) -> (i32, i32) {
    %c0_i32 = arith.constant 0 : i32
    %c0_i32_0 = arith.constant 0 : i32
    return %arg0, %c0_i32 : i32, i32
  }
  func.func @transform_1(%arg0: i32) -> (i32, i32) {
    %c0_i32 = arith.constant 0 : i32
    %c0_i32_0 = arith.constant 0 : i32
    %c0_i32_1 = arith.constant 0 : i32
    return %c0_i32, %c0_i32_0 : i32, i32
  }
  func.func @transform_2(%arg0: i32) -> (i32, i32) {
    %c0_i32 = arith.constant 0 : i32
    %c0_i32_0 = arith.constant 0 : i32
    %c0_i32_1 = arith.constant 0 : i32
    return %c0_i32, %c0_i32_0 : i32, i32
  }
  func.func @transform_3(%arg0: i32) -> (i32, i32) {
    %c0_i32 = arith.constant 0 : i32
    %c0_i32_0 = arith.constant 0 : i32
    return %arg0, %c0_i32 : i32, i32
  }
}

module attributes {stable_mosaic.version = 11 : i64} {
  func.func @_encoder_kernel(%arg0: i32, %arg1: memref<1x8x32xbf16, #tpu.memory_space<vmem>>, %arg2: memref<3x32x128xbf16, #tpu.memory_space<vmem>>, %arg3: memref<1x128xf32, #tpu.memory_space<vmem>>, %arg4: memref<3x128x128xbf16, #tpu.memory_space<vmem>>, %arg5: memref<1x128xf32, #tpu.memory_space<vmem>>, %arg6: memref<128x8xbf16, #tpu.memory_space<vmem>>, %arg7: memref<1x8xf32, #tpu.memory_space<vmem>>, %arg8: memref<1x8x8xf32, #tpu.memory_space<vmem>>, %arg9: memref<10x32xf32, #tpu.memory_space<vmem>>, %arg10: memref<10x128xf32, #tpu.memory_space<vmem>>) attributes {dimension_semantics = [#tpu.dimension_semantics<parallel>], iteration_bounds = array<i64: 4>, scalar_prefetch = 0 : i64, scratch_operands = 2 : i64, tpu.core_type = #tpu.core_type<tc>, window_params = [{transform_indices = @transform_0, window_bounds = array<i64: 1, 8, 32>}, {pipeline_mode = #tpu.pipeline_mode<synchronous>, transform_indices = @transform_1, window_bounds = array<i64: 3, 32, 128>}, {pipeline_mode = #tpu.pipeline_mode<synchronous>, transform_indices = @transform_2, window_bounds = array<i64: 1, 128>}, {pipeline_mode = #tpu.pipeline_mode<synchronous>, transform_indices = @transform_3, window_bounds = array<i64: 3, 128, 128>}, {pipeline_mode = #tpu.pipeline_mode<synchronous>, transform_indices = @transform_4, window_bounds = array<i64: 1, 128>}, {pipeline_mode = #tpu.pipeline_mode<synchronous>, transform_indices = @transform_5, window_bounds = array<i64: 128, 8>}, {pipeline_mode = #tpu.pipeline_mode<synchronous>, transform_indices = @transform_6, window_bounds = array<i64: 1, 8>}, {transform_indices = @transform_7, window_bounds = array<i64: 1, 8, 8>}]} {
    %cst = arith.constant 0.000000e+00 : f32
    %0 = vector.broadcast %cst : f32 to vector<1x32xf32>
    %c0 = arith.constant 0 : index
    %c0_0 = arith.constant 0 : index
    %1 = vector.load %arg9[%c0, %c0_0] : memref<10x32xf32, #tpu.memory_space<vmem>>, vector<1x32xf32>
    tpu.vector_store %arg9[%c0, %c0_0], %0 {strides = array<i32>} : memref<10x32xf32, #tpu.memory_space<vmem>>, vector<1x32xf32>,
    %cst_1 = arith.constant 0.000000e+00 : f32
    %2 = vector.broadcast %cst_1 : f32 to vector<1x32xf32>
    %c9 = arith.constant 9 : index
    %c0_2 = arith.constant 0 : index
    %3 = vector.load %arg9[%c9, %c0_2] : memref<10x32xf32, #tpu.memory_space<vmem>>, vector<1x32xf32>
    tpu.vector_store %arg9[%c9, %c0_2], %2 {strides = array<i32>} : memref<10x32xf32, #tpu.memory_space<vmem>>, vector<1x32xf32>,
    %c0_3 = arith.constant 0 : index
    %c0_4 = arith.constant 0 : index
    %c0_5 = arith.constant 0 : index
    %4 = vector.load %arg1[%c0_3, %c0_4, %c0_5] : memref<1x8x32xbf16, #tpu.memory_space<vmem>>, vector<1x8x32xbf16>
    %5 = vector.shape_cast %4 : vector<1x8x32xbf16> to vector<8x32xbf16>
    %6 = arith.extf %5 : vector<8x32xbf16> to vector<8x32xf32>
    %c1 = arith.constant 1 : index
    %c0_6 = arith.constant 0 : index
    %7 = vector.load %arg9[%c1, %c0_6] : memref<10x32xf32, #tpu.memory_space<vmem>>, vector<8x32xf32>
    tpu.vector_store %arg9[%c1, %c0_6], %6 {strides = array<i32>} : memref<10x32xf32, #tpu.memory_space<vmem>>, vector<8x32xf32>,
    %cst_7 = arith.constant 0.000000e+00 : f32
    %8 = vector.broadcast %cst_7 : f32 to vector<8x128xf32>
    %c0_8 = arith.constant 0 : index
    %c0_9 = arith.constant 0 : index
    %9 = vector.load %arg9[%c0_8, %c0_9] : memref<10x32xf32, #tpu.memory_space<vmem>>, vector<8x32xf32>
    %10 = arith.truncf %9 : vector<8x32xf32> to vector<8x32xbf16>
    %c0_10 = arith.constant 0 : index
    %c0_11 = arith.constant 0 : index
    %c0_12 = arith.constant 0 : index
    %11 = vector.load %arg2[%c0_10, %c0_11, %c0_12] : memref<3x32x128xbf16, #tpu.memory_space<vmem>>, vector<1x32x128xbf16>
    %12 = vector.shape_cast %11 : vector<1x32x128xbf16> to vector<32x128xbf16>
    %cst_13 = arith.constant dense<0.000000e+00> : vector<8x128xf32>
    %13 = tpu.matmul %10, %12, %cst_13 {dimension_numbers = #tpu.dot_dimension_numbers<[1], [0], [0], [1], [0, 0, 1, 1], [], []>} : vector<8x32xbf16>, vector<32x128xbf16>, vector<8x128xf32> -> vector<8x128xf32>
    %14 = arith.addf %8, %13 : vector<8x128xf32>
    %c1_14 = arith.constant 1 : index
    %c0_15 = arith.constant 0 : index
    %15 = vector.load %arg9[%c1_14, %c0_15] : memref<10x32xf32, #tpu.memory_space<vmem>>, vector<8x32xf32>
    %16 = arith.truncf %15 : vector<8x32xf32> to vector<8x32xbf16>
    %c1_16 = arith.constant 1 : index
    %c0_17 = arith.constant 0 : index
    %c0_18 = arith.constant 0 : index
    %17 = vector.load %arg2[%c1_16, %c0_17, %c0_18] : memref<3x32x128xbf16, #tpu.memory_space<vmem>>, vector<1x32x128xbf16>
    %18 = vector.shape_cast %17 : vector<1x32x128xbf16> to vector<32x128xbf16>
    %cst_19 = arith.constant dense<0.000000e+00> : vector<8x128xf32>
    %19 = tpu.matmul %16, %18, %cst_19 {dimension_numbers = #tpu.dot_dimension_numbers<[1], [0], [0], [1], [0, 0, 1, 1], [], []>} : vector<8x32xbf16>, vector<32x128xbf16>, vector<8x128xf32> -> vector<8x128xf32>
    %20 = arith.addf %14, %19 : vector<8x128xf32>
    %c2 = arith.constant 2 : index
    %c0_20 = arith.constant 0 : index
    %21 = vector.load %arg9[%c2, %c0_20] : memref<10x32xf32, #tpu.memory_space<vmem>>, vector<8x32xf32>
    %22 = arith.truncf %21 : vector<8x32xf32> to vector<8x32xbf16>
    %c2_21 = arith.constant 2 : index
    %c0_22 = arith.constant 0 : index
    %c0_23 = arith.constant 0 : index
    %23 = vector.load %arg2[%c2_21, %c0_22, %c0_23] : memref<3x32x128xbf16, #tpu.memory_space<vmem>>, vector<1x32x128xbf16>
    %24 = vector.shape_cast %23 : vector<1x32x128xbf16> to vector<32x128xbf16>
    %cst_24 = arith.constant dense<0.000000e+00> : vector<8x128xf32>
    %25 = tpu.matmul %22, %24, %cst_24 {dimension_numbers = #tpu.dot_dimension_numbers<[1], [0], [0], [1], [0, 0, 1, 1], [], []>} : vector<8x32xbf16>, vector<32x128xbf16>, vector<8x128xf32> -> vector<8x128xf32>
    %26 = arith.addf %20, %25 : vector<8x128xf32>
    %c0_25 = arith.constant 0 : index
    %c0_26 = arith.constant 0 : index
    %27 = vector.load %arg3[%c0_25, %c0_26] : memref<1x128xf32, #tpu.memory_space<vmem>>, vector<1x128xf32>
    %28 = vector.broadcast %27 : vector<1x128xf32> to vector<8x128xf32>
    %29 = arith.addf %26, %28 : vector<8x128xf32>
    %cst_27 = arith.constant 0.000000e+00 : f32
    %30 = vector.broadcast %cst_27 : f32 to vector<8x128xf32>
    %31 = arith.maximumf %29, %30 : vector<8x128xf32>
    %cst_28 = arith.constant 0.000000e+00 : f32
    %32 = vector.broadcast %cst_28 : f32 to vector<1x128xf32>
    %c0_29 = arith.constant 0 : index
    %c0_30 = arith.constant 0 : index
    %33 = vector.load %arg10[%c0_29, %c0_30] : memref<10x128xf32, #tpu.memory_space<vmem>>, vector<1x128xf32>
    tpu.vector_store %arg10[%c0_29, %c0_30], %32 {strides = array<i32>} : memref<10x128xf32, #tpu.memory_space<vmem>>, vector<1x128xf32>,
    %cst_31 = arith.constant 0.000000e+00 : f32
    %34 = vector.broadcast %cst_31 : f32 to vector<1x128xf32>
    %c9_32 = arith.constant 9 : index
    %c0_33 = arith.constant 0 : index
    %35 = vector.load %arg10[%c9_32, %c0_33] : memref<10x128xf32, #tpu.memory_space<vmem>>, vector<1x128xf32>
    tpu.vector_store %arg10[%c9_32, %c0_33], %34 {strides = array<i32>} : memref<10x128xf32, #tpu.memory_space<vmem>>, vector<1x128xf32>,
    %c1_34 = arith.constant 1 : index
    %c0_35 = arith.constant 0 : index
    %36 = vector.load %arg10[%c1_34, %c0_35] : memref<10x128xf32, #tpu.memory_space<vmem>>, vector<8x128xf32>
    tpu.vector_store %arg10[%c1_34, %c0_35], %31 {strides = array<i32>} : memref<10x128xf32, #tpu.memory_space<vmem>>, vector<8x128xf32>,
    %cst_36 = arith.constant 0.000000e+00 : f32
    %37 = vector.broadcast %cst_36 : f32 to vector<8x128xf32>
    %c0_37 = arith.constant 0 : index
    %c0_38 = arith.constant 0 : index
    %38 = vector.load %arg10[%c0_37, %c0_38] : memref<10x128xf32, #tpu.memory_space<vmem>>, vector<8x128xf32>
    %39 = arith.truncf %38 : vector<8x128xf32> to vector<8x128xbf16>
    %c0_39 = arith.constant 0 : index
    %c0_40 = arith.constant 0 : index
    %c0_41 = arith.constant 0 : index
    %40 = vector.load %arg4[%c0_39, %c0_40, %c0_41] : memref<3x128x128xbf16, #tpu.memory_space<vmem>>, vector<1x128x128xbf16>
    %41 = vector.shape_cast %40 : vector<1x128x128xbf16> to vector<128x128xbf16>
    %cst_42 = arith.constant dense<0.000000e+00> : vector<8x128xf32>
    %42 = tpu.matmul %39, %41, %cst_42 {dimension_numbers = #tpu.dot_dimension_numbers<[1], [0], [0], [1], [0, 0, 1, 1], [], []>} : vector<8x128xbf16>, vector<128x128xbf16>, vector<8x128xf32> -> vector<8x128xf32>
    %43 = arith.addf %37, %42 : vector<8x128xf32>
    %c1_43 = arith.constant 1 : index
    %c0_44 = arith.constant 0 : index
    %44 = vector.load %arg10[%c1_43, %c0_44] : memref<10x128xf32, #tpu.memory_space<vmem>>, vector<8x128xf32>
    %45 = arith.truncf %44 : vector<8x128xf32> to vector<8x128xbf16>
    %c1_45 = arith.constant 1 : index
    %c0_46 = arith.constant 0 : index
    %c0_47 = arith.constant 0 : index
    %46 = vector.load %arg4[%c1_45, %c0_46, %c0_47] : memref<3x128x128xbf16, #tpu.memory_space<vmem>>, vector<1x128x128xbf16>
    %47 = vector.shape_cast %46 : vector<1x128x128xbf16> to vector<128x128xbf16>
    %cst_48 = arith.constant dense<0.000000e+00> : vector<8x128xf32>
    %48 = tpu.matmul %45, %47, %cst_48 {dimension_numbers = #tpu.dot_dimension_numbers<[1], [0], [0], [1], [0, 0, 1, 1], [], []>} : vector<8x128xbf16>, vector<128x128xbf16>, vector<8x128xf32> -> vector<8x128xf32>
    %49 = arith.addf %43, %48 : vector<8x128xf32>
    %c2_49 = arith.constant 2 : index
    %c0_50 = arith.constant 0 : index
    %50 = vector.load %arg10[%c2_49, %c0_50] : memref<10x128xf32, #tpu.memory_space<vmem>>, vector<8x128xf32>
    %51 = arith.truncf %50 : vector<8x128xf32> to vector<8x128xbf16>
    %c2_51 = arith.constant 2 : index
    %c0_52 = arith.constant 0 : index
    %c0_53 = arith.constant 0 : index
    %52 = vector.load %arg4[%c2_51, %c0_52, %c0_53] : memref<3x128x128xbf16, #tpu.memory_space<vmem>>, vector<1x128x128xbf16>
    %53 = vector.shape_cast %52 : vector<1x128x128xbf16> to vector<128x128xbf16>
    %cst_54 = arith.constant dense<0.000000e+00> : vector<8x128xf32>
    %54 = tpu.matmul %51, %53, %cst_54 {dimension_numbers = #tpu.dot_dimension_numbers<[1], [0], [0], [1], [0, 0, 1, 1], [], []>} : vector<8x128xbf16>, vector<128x128xbf16>, vector<8x128xf32> -> vector<8x128xf32>
    %55 = arith.addf %49, %54 : vector<8x128xf32>
    %c0_55 = arith.constant 0 : index
    %c0_56 = arith.constant 0 : index
    %56 = vector.load %arg5[%c0_55, %c0_56] : memref<1x128xf32, #tpu.memory_space<vmem>>, vector<1x128xf32>
    %57 = vector.broadcast %56 : vector<1x128xf32> to vector<8x128xf32>
    %58 = arith.addf %55, %57 : vector<8x128xf32>
    %cst_57 = arith.constant 0.000000e+00 : f32
    %59 = vector.broadcast %cst_57 : f32 to vector<8x128xf32>
    %60 = arith.maximumf %58, %59 : vector<8x128xf32>
    %61 = arith.truncf %60 : vector<8x128xf32> to vector<8x128xbf16>
    %c0_58 = arith.constant 0 : index
    %c0_59 = arith.constant 0 : index
    %62 = vector.load %arg6[%c0_58, %c0_59] : memref<128x8xbf16, #tpu.memory_space<vmem>>, vector<128x8xbf16>
    %cst_60 = arith.constant dense<0.000000e+00> : vector<8x8xf32>
    %63 = tpu.matmul %61, %62, %cst_60 {dimension_numbers = #tpu.dot_dimension_numbers<[1], [0], [0], [1], [0, 0, 1, 1], [], []>} : vector<8x128xbf16>, vector<128x8xbf16>, vector<8x8xf32> -> vector<8x8xf32>
    %c0_61 = arith.constant 0 : index
    %c0_62 = arith.constant 0 : index
    %64 = vector.load %arg7[%c0_61, %c0_62] : memref<1x8xf32, #tpu.memory_space<vmem>>, vector<1x8xf32>
    %65 = vector.broadcast %64 : vector<1x8xf32> to vector<8x8xf32>
    %66 = arith.addf %63, %65 : vector<8x8xf32>
    %c0_63 = arith.constant 0 : index
    %c0_64 = arith.constant 0 : index
    %c0_65 = arith.constant 0 : index
    %67 = vector.load %arg8[%c0_63, %c0_64, %c0_65] : memref<1x8x8xf32, #tpu.memory_space<vmem>>, vector<1x8x8xf32>
    %68 = vector.shape_cast %67 : vector<1x8x8xf32> to vector<8x8xf32>
    %69 = vector.shape_cast %66 : vector<8x8xf32> to vector<1x8x8xf32>
    tpu.vector_store %arg8[%c0_63, %c0_64, %c0_65], %69 {strides = array<i32>} : memref<1x8x8xf32, #tpu.memory_space<vmem>>, vector<1x8x8xf32>,
    return
  }
  func.func @transform_0(%arg0: i32) -> (i32, i32, i32) {
    %c0_i32 = arith.constant 0 : i32
    %c0_i32_0 = arith.constant 0 : i32
    %c0_i32_1 = arith.constant 0 : i32
    return %arg0, %c0_i32, %c0_i32_0 : i32, i32, i32
  }
  func.func @transform_1(%arg0: i32) -> (i32, i32, i32) {
    %c0_i32 = arith.constant 0 : i32
    %c0_i32_0 = arith.constant 0 : i32
    %c0_i32_1 = arith.constant 0 : i32
    %c0_i32_2 = arith.constant 0 : i32
    return %c0_i32, %c0_i32_0, %c0_i32_1 : i32, i32, i32
  }
  func.func @transform_2(%arg0: i32) -> (i32, i32) {
    %c0_i32 = arith.constant 0 : i32
    %c0_i32_0 = arith.constant 0 : i32
    %c0_i32_1 = arith.constant 0 : i32
    return %c0_i32, %c0_i32_0 : i32, i32
  }
  func.func @transform_3(%arg0: i32) -> (i32, i32, i32) {
    %c0_i32 = arith.constant 0 : i32
    %c0_i32_0 = arith.constant 0 : i32
    %c0_i32_1 = arith.constant 0 : i32
    %c0_i32_2 = arith.constant 0 : i32
    return %c0_i32, %c0_i32_0, %c0_i32_1 : i32, i32, i32
  }
  func.func @transform_4(%arg0: i32) -> (i32, i32) {
    %c0_i32 = arith.constant 0 : i32
    %c0_i32_0 = arith.constant 0 : i32
    %c0_i32_1 = arith.constant 0 : i32
    return %c0_i32, %c0_i32_0 : i32, i32
  }
  func.func @transform_5(%arg0: i32) -> (i32, i32) {
    %c0_i32 = arith.constant 0 : i32
    %c0_i32_0 = arith.constant 0 : i32
    %c0_i32_1 = arith.constant 0 : i32
    return %c0_i32, %c0_i32_0 : i32, i32
  }
  func.func @transform_6(%arg0: i32) -> (i32, i32) {
    %c0_i32 = arith.constant 0 : i32
    %c0_i32_0 = arith.constant 0 : i32
    %c0_i32_1 = arith.constant 0 : i32
    return %c0_i32, %c0_i32_0 : i32, i32
  }
  func.func @transform_7(%arg0: i32) -> (i32, i32, i32) {
    %c0_i32 = arith.constant 0 : i32
    %c0_i32_0 = arith.constant 0 : i32
    %c0_i32_1 = arith.constant 0 : i32
    return %arg0, %c0_i32, %c0_i32_0 : i32, i32, i32
  }
}

module attributes {stable_mosaic.version = 11 : i64} {
  func.func @_decoder_kernel(%arg0: i32, %arg1: memref<1x8x8xf32, #tpu.memory_space<vmem>>, %arg2: memref<1x8x8xf32, #tpu.memory_space<vmem>>, %arg3: memref<8x3xbf16, #tpu.memory_space<vmem>>, %arg4: memref<8x3xbf16, #tpu.memory_space<vmem>>, %arg5: memref<1x3xf32, #tpu.memory_space<vmem>>, %arg6: memref<1x16x3xf32, #tpu.memory_space<vmem>>) attributes {dimension_semantics = [#tpu.dimension_semantics<parallel>], iteration_bounds = array<i64: 2>, scalar_prefetch = 0 : i64, scratch_operands = 0 : i64, tpu.core_type = #tpu.core_type<tc>, window_params = [{transform_indices = @transform_0, window_bounds = array<i64: 1, 8, 8>}, {transform_indices = @transform_1, window_bounds = array<i64: 1, 8, 8>}, {pipeline_mode = #tpu.pipeline_mode<synchronous>, transform_indices = @transform_2, window_bounds = array<i64: 8, 3>}, {pipeline_mode = #tpu.pipeline_mode<synchronous>, transform_indices = @transform_3, window_bounds = array<i64: 8, 3>}, {pipeline_mode = #tpu.pipeline_mode<synchronous>, transform_indices = @transform_4, window_bounds = array<i64: 1, 3>}, {transform_indices = @transform_5, window_bounds = array<i64: 1, 16, 3>}]} {
    %c0 = arith.constant 0 : index
    %c0_0 = arith.constant 0 : index
    %c0_1 = arith.constant 0 : index
    %0 = vector.load %arg1[%c0, %c0_0, %c0_1] : memref<1x8x8xf32, #tpu.memory_space<vmem>>, vector<1x8x8xf32>
    %1 = vector.shape_cast %0 : vector<1x8x8xf32> to vector<8x8xf32>
    %c0_2 = arith.constant 0 : index
    %c0_3 = arith.constant 0 : index
    %c0_4 = arith.constant 0 : index
    %2 = vector.load %arg2[%c0_2, %c0_3, %c0_4] : memref<1x8x8xf32, #tpu.memory_space<vmem>>, vector<1x8x8xf32>
    %3 = vector.shape_cast %2 : vector<1x8x8xf32> to vector<8x8xf32>
    %c0_5 = arith.constant 0 : index
    %c0_6 = arith.constant 0 : index
    %4 = vector.load %arg3[%c0_5, %c0_6] : memref<8x3xbf16, #tpu.memory_space<vmem>>, vector<8x3xbf16>
    %c0_7 = arith.constant 0 : index
    %c0_8 = arith.constant 0 : index
    %5 = vector.load %arg4[%c0_7, %c0_8] : memref<8x3xbf16, #tpu.memory_space<vmem>>, vector<8x3xbf16>
    %c0_9 = arith.constant 0 : index
    %c0_10 = arith.constant 0 : index
    %6 = vector.load %arg5[%c0_9, %c0_10] : memref<1x3xf32, #tpu.memory_space<vmem>>, vector<1x3xf32>
    %7 = arith.truncf %1 : vector<8x8xf32> to vector<8x8xbf16>
    %cst = arith.constant dense<0.000000e+00> : vector<8x3xf32>
    %8 = tpu.matmul %7, %4, %cst {dimension_numbers = #tpu.dot_dimension_numbers<[1], [0], [0], [1], [0, 0, 1, 1], [], []>} : vector<8x8xbf16>, vector<8x3xbf16>, vector<8x3xf32> -> vector<8x3xf32>
    %9 = arith.subf %1, %3 : vector<8x8xf32>
    %10 = arith.truncf %9 : vector<8x8xf32> to vector<8x8xbf16>
    %cst_11 = arith.constant dense<0.000000e+00> : vector<8x3xf32>
    %11 = tpu.matmul %10, %5, %cst_11 {dimension_numbers = #tpu.dot_dimension_numbers<[1], [0], [0], [1], [0, 0, 1, 1], [], []>} : vector<8x8xbf16>, vector<8x3xbf16>, vector<8x3xf32> -> vector<8x3xf32>
    %12 = arith.addf %8, %11 : vector<8x3xf32>
    %13 = vector.broadcast %6 : vector<1x3xf32> to vector<8x3xf32>
    %14 = arith.addf %12, %13 : vector<8x3xf32>
    %15 = arith.truncf %3 : vector<8x8xf32> to vector<8x8xbf16>
    %cst_12 = arith.constant dense<0.000000e+00> : vector<8x3xf32>
    %16 = tpu.matmul %15, %4, %cst_12 {dimension_numbers = #tpu.dot_dimension_numbers<[1], [0], [0], [1], [0, 0, 1, 1], [], []>} : vector<8x8xbf16>, vector<8x3xbf16>, vector<8x3xf32> -> vector<8x3xf32>
    %17 = arith.subf %3, %1 : vector<8x8xf32>
    %18 = arith.truncf %17 : vector<8x8xf32> to vector<8x8xbf16>
    %cst_13 = arith.constant dense<0.000000e+00> : vector<8x3xf32>
    %19 = tpu.matmul %18, %5, %cst_13 {dimension_numbers = #tpu.dot_dimension_numbers<[1], [0], [0], [1], [0, 0, 1, 1], [], []>} : vector<8x8xbf16>, vector<8x3xbf16>, vector<8x3xf32> -> vector<8x3xf32>
    %20 = arith.addf %16, %19 : vector<8x3xf32>
    %21 = vector.broadcast %6 : vector<1x3xf32> to vector<8x3xf32>
    %22 = arith.addf %20, %21 : vector<8x3xf32>
    %c0_14 = arith.constant 0 : index
    %c0_15 = arith.constant 0 : index
    %c0_16 = arith.constant 0 : index
    %23 = vector.load %arg6[%c0_14, %c0_15, %c0_16] : memref<1x16x3xf32, #tpu.memory_space<vmem>>, vector<1x8x3xf32>
    %24 = vector.shape_cast %23 : vector<1x8x3xf32> to vector<8x3xf32>
    %25 = vector.shape_cast %14 : vector<8x3xf32> to vector<1x8x3xf32>
    tpu.vector_store %arg6[%c0_14, %c0_15, %c0_16], %25 {strides = array<i32>} : memref<1x16x3xf32, #tpu.memory_space<vmem>>, vector<1x8x3xf32>,
    %c0_17 = arith.constant 0 : index
    %c8 = arith.constant 8 : index
    %c0_18 = arith.constant 0 : index
    %26 = vector.load %arg6[%c0_17, %c8, %c0_18] : memref<1x16x3xf32, #tpu.memory_space<vmem>>, vector<1x8x3xf32>
    %27 = vector.shape_cast %26 : vector<1x8x3xf32> to vector<8x3xf32>
    %28 = vector.shape_cast %22 : vector<8x3xf32> to vector<1x8x3xf32>
    tpu.vector_store %arg6[%c0_17, %c8, %c0_18], %28 {strides = array<i32>} : memref<1x16x3xf32, #tpu.memory_space<vmem>>, vector<1x8x3xf32>,
    return
  }
  func.func @transform_0(%arg0: i32) -> (i32, i32, i32) {
    %c0_i32 = arith.constant 0 : i32
    %c0_i32_0 = arith.constant 0 : i32
    %c0_i32_1 = arith.constant 0 : i32
    return %arg0, %c0_i32, %c0_i32_0 : i32, i32, i32
  }
  func.func @transform_1(%arg0: i32) -> (i32, i32, i32) {
    %c0_i32 = arith.constant 0 : i32
    %c0_i32_0 = arith.constant 0 : i32
    %c0_i32_1 = arith.constant 0 : i32
    return %arg0, %c0_i32, %c0_i32_0 : i32, i32, i32
  }
  func.func @transform_2(%arg0: i32) -> (i32, i32) {
    %c0_i32 = arith.constant 0 : i32
    %c0_i32_0 = arith.constant 0 : i32
    %c0_i32_1 = arith.constant 0 : i32
    return %c0_i32, %c0_i32_0 : i32, i32
  }
  func.func @transform_3(%arg0: i32) -> (i32, i32) {
    %c0_i32 = arith.constant 0 : i32
    %c0_i32_0 = arith.constant 0 : i32
    %c0_i32_1 = arith.constant 0 : i32
    return %c0_i32, %c0_i32_0 : i32, i32
  }
  func.func @transform_4(%arg0: i32) -> (i32, i32) {
    %c0_i32 = arith.constant 0 : i32
    %c0_i32_0 = arith.constant 0 : i32
    %c0_i32_1 = arith.constant 0 : i32
    return %c0_i32, %c0_i32_0 : i32, i32
  }
  func.func @transform_5(%arg0: i32) -> (i32, i32, i32) {
    %c0_i32 = arith.constant 0 : i32
    %c0_i32_0 = arith.constant 0 : i32
    %c0_i32_1 = arith.constant 0 : i32
    return %arg0, %c0_i32, %c0_i32_0 : i32, i32, i32
  }
}

</mosaic_0001>

<llo_original>
// kernel: spec2dcnn_2day_v2_forward.3
$region0: #{spec2dcnn_2day_v2_forward.3}
  #allocation0 [shape = 'u32[]', space=smem, size = 0x4, offset = 0x4, fixed_abs, tag = 'smem constant byte address 0x4 - core index']
  #allocation1 [shape = 'u32[144,128]{1,0:T(1,128)}', space=vmem, size = 0x12000, scoped, tag = 'internal scratch']
  %s0 = inlined_call_operand.vmem [shape: bf16[32,12], index: 0, kind: input, shape index: {}]
  %s1 = inlined_call_operand.vmem [shape: bf16[12,32], index: 1, kind: input, shape index: {}]
  %s2 = inlined_call_operand.vmem [shape: f32[1,32], index: 2, kind: input, shape index: {}]
  %s3 = inlined_call_operand.vmem [shape: bf16[32,32], index: 3, kind: output, shape index: {}]
  %s4 = sld [smem:[#allocation0]]
  $region22: #{spec2dcnn_2day_v2_forward.3} parent=0
    _
  %s6 = ssub.s32 1, %s4
  %s7 = scalar_select 0, %s6, %s4
  // Predicated region
  $region2: #{spec2dcnn_2day_v2_forward.3} parent=0 // pred_check
    _
  $region3: #{spec2dcnn_2day_v2_forward.3} parent=0 // pred_check_branch
    %9 = sbr.rel (0) target = $region5
  $region4: #{spec2dcnn_2day_v2_forward.3} parent=0 // pred_region
    _
  $region5: #{spec2dcnn_2day_v2_forward.3} parent=0 // pred_fallthru
    _
  // Predicated region
  $region6: #{spec2dcnn_2day_v2_forward.3} parent=0 // pred_check
    _
  $region7: #{spec2dcnn_2day_v2_forward.3} parent=0 // pred_check_branch
    %11 = sbr.rel (0) target = $region9
  $region8: #{spec2dcnn_2day_v2_forward.3} parent=0 // pred_region
    _
  $region9: #{spec2dcnn_2day_v2_forward.3} parent=0 // pred_fallthru
    _
  // Predicated region
  $region10: #{spec2dcnn_2day_v2_forward.3} parent=0 // pred_check
    _
  $region11: #{spec2dcnn_2day_v2_forward.3} parent=0 // pred_check_branch
    %13 = sbr.rel (0) target = $region13
  $region12: #{spec2dcnn_2day_v2_forward.3} parent=0 // pred_region
    _
  $region13: #{spec2dcnn_2day_v2_forward.3} parent=0 // pred_fallthru
    _
  %v15 = vld [vmem:[%s0] sm:$0xf]
  %v16 = vld [vmem:[%s0 + $0x4] sm:$0xf]
  %v17 = vld [vmem:[%s0 + $0x8] sm:$0xf]
  %v18 = vld [vmem:[%s0 + $0xc] sm:$0xf]
  %v19 = vld [vmem:[%s1] sm:$0xf]
  %v20 = vld [vmem:[%s1 + $0x4] sm:$0x3]
  %v21 = vld [vmem:[%s2] sm:$0x1]
  %v23 = vlaneseq
  %v24 = vshrl.u32 %v23, 7
  %v25 = vsub.s32 0, %v24
  %v26 = vrot.slane %v21, %v25
  %v32 = vunpack.c.l.b16 %v15
  %v33 = vunpack.c.l.b16 %v16
  %v34 = vunpack.c.l.b16 %v17
  %v35 = vunpack.c.l.b16 %v18
  %v36 = vpack.c.b16 %v33, %v32
  %v37 = vpack.c.b16 %v35, %v34
  %v40 = vunpack.c.l.b16 %v19
  %v41 = vunpack.c.l.b16 %v20
  %v42 = vpack.c.b16 %v41, %v40
  %vm43 = vcmask 97280
  %v45 = vsel %vm43, %v36, 0
  %v48 = vsel %vm43, %v37, 0
  %vm50 = vcmask 1045504
  %v52 = vsel %vm50, %v42, 0
  %54 = vmatprep.subr.bf16.mxu0 0
  %55 = vmatpush1.bf16.msra.mxu0 %v52
  %56 = vmatprep.subr.bf16.mxu0 0
  %57 = vmatpush1.bf16.msra.mxu0 0
  %58 = vmatprep.subr.bf16.mxu0 0
  %59 = vmatpush1.bf16.msra.mxu0 0
  %60 = vmatprep.subr.bf16.mxu0 0
  %61 = vmatpush1.bf16.msra.mxu0 0
  %62 = vmatprep.subr.bf16.mxu0 0
  %63 = vmatpush1.bf16.msra.mxu0 0
  %64 = vmatprep.subr.bf16.mxu0 0
  %65 = vmatpush1.bf16.msra.mxu0 0
  %66 = vmatprep.subr.bf16.mxu0 0
  %67 = vmatpush1.bf16.msra.mxu0 0
  %68 = vmatprep.subr.bf16.mxu0 0
  %69 = vmatpush1.bf16.msra.mxu0 0
  %70 = vmatprep.subr.bf16.mxu0 0
  %71 = vmatpush1.bf16.msra.mxu0 0
  %72 = vmatprep.subr.bf16.mxu0 0
  %73 = vmatpush1.bf16.msra.mxu0 0
  %74 = vmatprep.subr.bf16.mxu0 0
  %75 = vmatpush1.bf16.msra.mxu0 0
  %76 = vmatprep.subr.bf16.mxu0 0
  %77 = vmatpush1.bf16.msra.mxu0 0
  %78 = vmatprep.subr.bf16.mxu0 0
  %79 = vmatpush1.bf16.msra.mxu0 0
  %80 = vmatprep.subr.bf16.mxu0 0
  %81 = vmatpush1.bf16.msra.mxu0 0
  %82 = vmatprep.subr.bf16.mxu0 0
  %83 = vmatpush1.bf16.msra.mxu0 0
  %84 = vmatprep.subr.bf16.mxu0 0
  %85 = vmatpush1.bf16.msra.mxu0 0
  %86 = vmatprep.mubr.bf16.mxu0 0
  %87 = vmatmul.mubr.bf16.gmra.mrb[0].mxu0 %v45
  %v88 = vpop.f32.mrb[0].mxu0
  %v89 = vadd.f32 %v26, %v88
  %v90 = vpop.f32.mrb[0].mxu0
  %v91 = vpop.f32.mrb[0].mxu0
  %v92 = vadd.f32 %v26, %v91
  %v93 = vpop.f32.mrb[0].mxu0
  %94 = vmatprep.mubr.bf16.mxu0 0
  %95 = vmatmul.mubr.bf16.gmra.mrb[0].mxu0 %v48
  %v96 = vpop.f32.mrb[0].mxu0
  %v97 = vadd.f32 %v26, %v96
  %v98 = vpop.f32.mrb[0].mxu0
  %v99 = vpop.f32.mrb[0].mxu0
  %v100 = vadd.f32 %v26, %v99
  %v101 = vpop.f32.mrb[0].mxu0
  %102 = vdwg.mxu0
  %v103 = vmax.f32 %v89, 0.0
  %v104 = vmax.f32 %v92, 0.0
  %v105 = vmax.f32 %v97, 0.0
  %v106 = vmax.f32 %v100, 0.0
  %v107 = vpack.c.bf16 %v104, %v103
  %v108 = vpack.c.bf16 %v106, %v105
  %v111 = vunpack.c.l.b16 %v107
  %v112 = vunpack.c.h.b16 %v107
  %v113 = vunpack.c.l.b16 %v108
  %v114 = vunpack.c.h.b16 %v108
  %v115 = vpack.c.b16 %v111, %v111
  %v116 = vpack.c.b16 %v112, %v112
  %v117 = vpack.c.b16 %v113, %v113
  %v118 = vpack.c.b16 %v114, %v114
  %vm123 = vcmask 257024
  %124 = vst.msk [vmem:[%s3] sm:$0xf] %vm123, %v115
  %125 = vst.msk [vmem:[%s3 + $0x4] sm:$0xf] %vm123, %v116
  %126 = vst.msk [vmem:[%s3 + $0x8] sm:$0xf] %vm123, %v117
  %127 = vst.msk [vmem:[%s3 + $0xc] sm:$0xf] %vm123, %v118
  // Predicated region
  $region14: #{spec2dcnn_2day_v2_forward.3} parent=0 // pred_check
    _
  $region15: #{spec2dcnn_2day_v2_forward.3} parent=0 // pred_check_branch
    %129 = sbr.rel (0) target = $region17
  $region16: #{spec2dcnn_2day_v2_forward.3} parent=0 // pred_region
    _
  $region17: #{spec2dcnn_2day_v2_forward.3} parent=0 // pred_fallthru
    _
  // Predicated region
  $region18: #{spec2dcnn_2day_v2_forward.3} parent=0 // pred_check
    _
  $region19: #{spec2dcnn_2day_v2_forward.3} parent=0 // pred_check_branch
    %131 = sbr.rel (0) target = $region21
  $region20: #{spec2dcnn_2day_v2_forward.3} parent=0 // pred_region
    _
  $region21: #{spec2dcnn_2day_v2_forward.3} parent=0 // pred_fallthru
    _

// kernel: spec2dcnn_2day_v2_forward.5
$region0: #{spec2dcnn_2day_v2_forward.5}
  #allocation0 [shape = 'u32[]', space=smem, size = 0x4, offset = 0x4, fixed_abs, tag = 'smem constant byte address 0x4 - core index']
  #allocation1 [shape = 'u32[144,128]{1,0:T(1,128)}', space=vmem, size = 0x12000, scoped, tag = 'internal scratch']
  %s0 = inlined_call_operand.vmem [shape: f32[2,8,8], index: 0, kind: input, shape index: {}]
  %s1 = inlined_call_operand.vmem [shape: f32[2,8,8], index: 1, kind: input, shape index: {}]
  %s2 = inlined_call_operand.vmem [shape: bf16[8,3], index: 2, kind: input, shape index: {}]
  %s3 = inlined_call_operand.vmem [shape: bf16[8,3], index: 3, kind: input, shape index: {}]
  %s4 = inlined_call_operand.vmem [shape: f32[1,3], index: 4, kind: input, shape index: {}]
  %s5 = inlined_call_operand.vmem [shape: f32[2,16,3], index: 5, kind: output, shape index: {}]
  %s6 = sld [smem:[#allocation0]]
  $region53: #{spec2dcnn_2day_v2_forward.5} parent=0
    _
  %s8 = ssub.s32 1, %s6
  %s9 = scalar_select 0, %s8, %s6
  loop: start=0, step=1, limit=4
  $region2: #{spec2dcnn_2day_v2_forward.5} parent=0 // loop_pre_header
    _
  $region3: #{spec2dcnn_2day_v2_forward.5} parent=0 // loop_header
    %s11 = sphi 0, %s15
    %p12 = scmp.ge.s32.totalorder %s11, 4
    %s21 = sphi 0, %s23
    %s24 = sphi 0, %s21
    %s25 = sphi 0, %s24
    %s41 = sphi 0, %s25
    %s47 = sphi 0, %s49
    %s50 = sphi 0, %s47
    %s51 = sphi 0, %s50
    %s67 = sphi 0, %s51
    %s71 = sphi 0, %s71
    %s73 = sphi 0, %s71
    %s74 = sphi 0, %s73
    %s88 = sphi 0, %s74
    %s92 = sphi 0, %s92
    %s94 = sphi 0, %s92
    %s95 = sphi 0, %s94
    %s109 = sphi 0, %s95
    %s113 = sphi 0, %s113
    %s115 = sphi 0, %s113
    %s116 = sphi 0, %s115
    %s130 = sphi 0, %s116
    %s136 = sphi 0, %s138
    %s139 = sphi 0, %s136
    %s140 = sphi 0, %s139
    %s156 = sphi 0, %s140
  $region4: #{spec2dcnn_2day_v2_forward.5} parent=0 // loop_header_branch
    %14 = sbr.rel (%p12) target = $region8
  $region5: #{spec2dcnn_2day_v2_forward.5} parent=0 // loop_body
    %s16 = ssub.s32 %s11, 1
    %s17 = ssub.s32 %s11, 2
    %s18 = sadd.s32 %s11, 1
    %s19 = ssub.s32 %s11, %s18
    %p20 = scmp.eq.s32.totalorder %s19, 0
    %s22 = sadd.s32 %s21, 1
    %s23 = scalar_select %p20, %s21, %s22
    %p26 = pneg %p20
    %p27 = scmp.eq.s32.totalorder %s11, 1
    %p28 = por %p26, %p27
    %p29 = scmp.ne.s32.totalorder %s21, %s24
    %p30 = scmp.eq.s32.totalorder %s11, 0
    %p31 = por %p29, %p30
    %p32 = scmp.ne.s32.totalorder %s21, %s24
    %p33 = scmp.eq.s32.totalorder %s16, 1
    %p34 = por %p32, %p33
    %p35 = scmp.ne.s32.totalorder %s24, %s25
    %p36 = scmp.eq.s32.totalorder %s16, 0
    %p37 = por %p35, %p36
    %p38 = scmp.ne.s32.totalorder %s24, %s25
    %p39 = scmp.eq.s32.totalorder %s17, 1
    %p40 = por %p38, %p39
    %p42 = scmp.ne.s32.totalorder %s25, %s41
    %p43 = scmp.eq.s32.totalorder %s17, 0
    %p44 = por %p42, %p43
    %s45 = ssub.s32 %s11, %s18
    %p46 = scmp.eq.s32.totalorder %s45, 0
    %s48 = sadd.s32 %s47, 1
    %s49 = scalar_select %p46, %s47, %s48
    %p52 = pneg %p46
    %p53 = scmp.eq.s32.totalorder %s11, 1
    %p54 = por %p52, %p53
    %p55 = scmp.ne.s32.totalorder %s47, %s50
    %p56 = scmp.eq.s32.totalorder %s11, 0
    %p57 = por %p55, %p56
    %p58 = scmp.ne.s32.totalorder %s47, %s50
    %p59 = scmp.eq.s32.totalorder %s16, 1
    %p60 = por %p58, %p59
    %p61 = scmp.ne.s32.totalorder %s50, %s51
    %p62 = scmp.eq.s32.totalorder %s16, 0
    %p63 = por %p61, %p62
    %p64 = scmp.ne.s32.totalorder %s50, %s51
    %p65 = scmp.eq.s32.totalorder %s17, 1
    %p66 = por %p64, %p65
    %p68 = scmp.ne.s32.totalorder %s51, %s67
    %p69 = scmp.eq.s32.totalorder %s17, 0
    %p70 = por %p68, %p69
    %s72 = sadd.s32 %s71, 1
    %p75 = scmp.eq.s32.totalorder %s11, 1
    %p76 = scmp.ne.s32.totalorder %s71, %s73
    %p77 = scmp.eq.s32.totalorder %s11, 0
    %p78 = por %p76, %p77
    %p79 = scmp.ne.s32.totalorder %s71, %s73
    %p80 = scmp.eq.s32.totalorder %s16, 1
    %p81 = por %p79, %p80
    %p82 = scmp.ne.s32.totalorder %s73, %s74
    %p83 = scmp.eq.s32.totalorder %s16, 0
    %p84 = por %p82, %p83
    %p85 = scmp.ne.s32.totalorder %s73, %s74
    %p86 = scmp.eq.s32.totalorder %s17, 1
    %p87 = por %p85, %p86
    %p89 = scmp.ne.s32.totalorder %s74, %s88
    %p90 = scmp.eq.s32.totalorder %s17, 0
    %p91 = por %p89, %p90
    %s93 = sadd.s32 %s92, 1
    %p96 = scmp.eq.s32.totalorder %s11, 1
    %p97 = scmp.ne.s32.totalorder %s92, %s94
    %p98 = scmp.eq.s32.totalorder %s11, 0
    %p99 = por %p97, %p98
    %p100 = scmp.ne.s32.totalorder %s92, %s94
    %p101 = scmp.eq.s32.totalorder %s16, 1
    %p102 = por %p100, %p101
    %p103 = scmp.ne.s32.totalorder %s94, %s95
    %p104 = scmp.eq.s32.totalorder %s16, 0
    %p105 = por %p103, %p104
    %p106 = scmp.ne.s32.totalorder %s94, %s95
    %p107 = scmp.eq.s32.totalorder %s17, 1
    %p108 = por %p106, %p107
    %p110 = scmp.ne.s32.totalorder %s95, %s109
    %p111 = scmp.eq.s32.totalorder %s17, 0
    %p112 = por %p110, %p111
    %s114 = sadd.s32 %s113, 1
    %p117 = scmp.eq.s32.totalorder %s11, 1
    %p118 = scmp.ne.s32.totalorder %s113, %s115
    %p119 = scmp.eq.s32.totalorder %s11, 0
    %p120 = por %p118, %p119
    %p121 = scmp.ne.s32.totalorder %s113, %s115
    %p122 = scmp.eq.s32.totalorder %s16, 1
    %p123 = por %p121, %p122
    %p124 = scmp.ne.s32.totalorder %s115, %s116
    %p125 = scmp.eq.s32.totalorder %s16, 0
    %p126 = por %p124, %p125
    %p127 = scmp.ne.s32.totalorder %s115, %s116
    %p128 = scmp.eq.s32.totalorder %s17, 1
    %p129 = por %p127, %p128
    %p131 = scmp.ne.s32.totalorder %s116, %s130
    %p132 = scmp.eq.s32.totalorder %s17, 0
    %p133 = por %p131, %p132
    %s134 = ssub.s32 %s11, %s18
    %p135 = scmp.eq.s32.totalorder %s134, 0
    %s137 = sadd.s32 %s136, 1
    %s138 = scalar_select %p135, %s136, %s137
    %p141 = pneg %p135
    %p142 = scmp.eq.s32.totalorder %s11, 1
    %p143 = por %p141, %p142
    %p144 = scmp.ne.s32.totalorder %s136, %s139
    %p145 = scmp.eq.s32.totalorder %s11, 0
    %p146 = por %p144, %p145
    %p147 = scmp.ne.s32.totalorder %s136, %s139
    %p148 = scmp.eq.s32.totalorder %s16, 1
    %p149 = por %p147, %p148
    %p150 = scmp.ne.s32.totalorder %s139, %s140
    %p151 = scmp.eq.s32.totalorder %s16, 0
    %p152 = por %p150, %p151
    %p153 = scmp.ne.s32.totalorder %s139, %s140
    %p154 = scmp.eq.s32.totalorder %s17, 1
    %p155 = por %p153, %p154
    %p157 = scmp.ne.s32.totalorder %s140, %s156
    %p158 = scmp.eq.s32.totalorder %s17, 0
    %p159 = por %p157, %p158
    %p160 = scmp.le.s32.totalorder 1, %s11
    %p161 = scmp.lt.s32.totalorder %s11, 3
    %p162 = pnand %p160, %p161
    %p163 = pneg %p162
    // Predicated region
    $region9: #{spec2dcnn_2day_v2_forward.5} parent=5 // pred_check
      _
    $region10: #{spec2dcnn_2day_v2_forward.5} parent=5 // pred_check_branch
      %165 = sbr.rel (%p162) target = $region12
    $region11: #{spec2dcnn_2day_v2_forward.5} parent=5 // pred_region
      %s166 = ssub.s32 %s11, 1
      // Predicated region
      $region13: #{spec2dcnn_2day_v2_forward.5} parent=11 // pred_check
        %p167 = pneg %p84
      $region14: #{spec2dcnn_2day_v2_forward.5} parent=11 // pred_check_branch
        %169 = sbr.rel (%p167) target = $region16
      $region15: #{spec2dcnn_2day_v2_forward.5} parent=11 // pred_region
        _
      $region16: #{spec2dcnn_2day_v2_forward.5} parent=11 // pred_fallthru
        _
      // Predicated region
      $region17: #{spec2dcnn_2day_v2_forward.5} parent=11 // pred_check
        %p170 = pneg %p105
      $region18: #{spec2dcnn_2day_v2_forward.5} parent=11 // pred_check_branch
        %172 = sbr.rel (%p170) target = $region20
      $region19: #{spec2dcnn_2day_v2_forward.5} parent=11 // pred_region
        _
      $region20: #{spec2dcnn_2day_v2_forward.5} parent=11 // pred_fallthru
        _
      // Predicated region
      $region21: #{spec2dcnn_2day_v2_forward.5} parent=11 // pred_check
        %p173 = pneg %p126
      $region22: #{spec2dcnn_2day_v2_forward.5} parent=11 // pred_check_branch
        %175 = sbr.rel (%p173) target = $region24
      $region23: #{spec2dcnn_2day_v2_forward.5} parent=11 // pred_region
        _
      $region24: #{spec2dcnn_2day_v2_forward.5} parent=11 // pred_fallthru
        _
    $region12: #{spec2dcnn_2day_v2_forward.5} parent=5 // pred_fallthru
      _
    %p176 = scmp.lt.s32.totalorder %s11, 2
    // Predicated region
    $region25: #{spec2dcnn_2day_v2_forward.5} parent=5 // pred_check
      %p177 = pneg %p176
    $region26: #{spec2dcnn_2day_v2_forward.5} parent=5 // pred_check_branch
      %179 = sbr.rel (%p177) target = $region28
    $region27: #{spec2dcnn_2day_v2_forward.5} parent=5 // pred_region
      // Predicated region
      $region29: #{spec2dcnn_2day_v2_forward.5} parent=27 // pred_check
        %p180 = pneg %p31
      $region30: #{spec2dcnn_2day_v2_forward.5} parent=27 // pred_check_branch
        %182 = sbr.rel (%p180) target = $region32
      $region31: #{spec2dcnn_2day_v2_forward.5} parent=27 // pred_region
        %p183 = scmp.lt.s32.totalorder %s11, 1
        %s184 = scalar_select %p183, %s11, 1
        %s185 = smul.addr %s184, 8
        %s186 = scalar_lea.vmem %s0, %s185
      $region32: #{spec2dcnn_2day_v2_forward.5} parent=27 // pred_fallthru
        _
      // Predicated region
      $region33: #{spec2dcnn_2day_v2_forward.5} parent=27 // pred_check
        %p187 = pneg %p57
      $region34: #{spec2dcnn_2day_v2_forward.5} parent=27 // pred_check_branch
        %189 = sbr.rel (%p187) target = $region36
      $region35: #{spec2dcnn_2day_v2_forward.5} parent=27 // pred_region
        %p190 = scmp.lt.s32.totalorder %s11, 1
        %s191 = scalar_select %p190, %s11, 1
        %s192 = smul.addr %s191, 8
        %s193 = scalar_lea.vmem %s1, %s192
      $region36: #{spec2dcnn_2day_v2_forward.5} parent=27 // pred_fallthru
        _
    $region28: #{spec2dcnn_2day_v2_forward.5} parent=5 // pred_fallthru
      _
    %p194 = scmp.le.s32.totalorder 1, %s11
    %p195 = scmp.lt.s32.totalorder %s11, 3
    %p196 = pnand %p194, %p195
    %p197 = pneg %p196
    // Predicated region
    $region37: #{spec2dcnn_2day_v2_forward.5} parent=5 // pred_check
      _
    $region38: #{spec2dcnn_2day_v2_forward.5} parent=5 // pred_check_branch
      %199 = sbr.rel (%p196) target = $region40
    $region39: #{spec2dcnn_2day_v2_forward.5} parent=5 // pred_region
      %s200 = ssub.s32 %s11, 1
      %p201 = scmp.lt.s32.totalorder %s16, 1
      %s202 = scalar_select %p201, %s16, 1
      %s203 = smul.addr %s202, 8
      %s204 = scalar_lea.vmem %s0, %s203
      %p205 = pneg %p37
      %p206 = pneg %p34
      %p207 = scmp.lt.s32.totalorder %s16, 1
      %s208 = scalar_select %p207, %s16, 1
      %s209 = smul.addr %s208, 8
      %s210 = scalar_lea.vmem %s1, %s209
      %p211 = pneg %p63
      %p212 = pneg %p60
      %p213 = pneg %p84
      %p214 = pneg %p81
      %p215 = pneg %p105
      %p216 = pneg %p102
      %p217 = pneg %p126
      %p218 = pneg %p123
      %p219 = pneg %p152
      %p220 = pneg %p149
      %p221 = scmp.lt.s32.totalorder %s16, 1
      %s222 = scalar_select %p221, %s16, 1
      %s223 = smul.addr %s222, 2
      %s224 = smul.addr %s223, 8
      %s225 = scalar_lea.vmem %s5, %s224
      %p226 = scmp.lt.s32.totalorder %s16, 1
      %s227 = scalar_select %p226, %s16, 1
      %s228 = smul.addr %s227, 8
      %s229 = scalar_lea.vmem %s0, %s228
      %p230 = scmp.lt.s32.totalorder %s16, 1
      %s231 = scalar_select %p230, %s16, 1
      %s232 = smul.addr %s231, 8
      %s233 = scalar_lea.vmem %s1, %s232
      %p234 = scmp.lt.s32.totalorder %s16, 1
      %s235 = scalar_select %p234, %s16, 1
      %s236 = smul.addr %s235, 2
      %s237 = smul.addr %s236, 8
      %s238 = scalar_lea.vmem %s5, %s237
      %v240 = vld [vmem:[%s229] sm:$0xff]
      %v241 = vld [vmem:[%s233] sm:$0xff]
      %v242 = vld [vmem:[%s2] sm:$0xf]
      %v243 = vld [vmem:[%s3] sm:$0xf]
      %v244 = vld [vmem:[%s4] sm:$0x1]
      %v245 = vpack.c.bf16 %v240, %v240
      %v246 = vsub.f32 %v240, %v241
      %v247 = vpack.c.bf16 %v246, %v246
      %vm248 = vcmask 64512
      %v250 = vsel %vm248, %v247, 0
      %vm252 = vcmask 1043456
      %v254 = vsel %vm252, %v243, 0
      %256 = vmatprep.subr.bf16.mxu0 0
      %257 = vmatpush1.bf16.msra.mxu0 %v254
      %258 = vmatprep.subr.bf16.mxu0 0
      %259 = vmatpush1.bf16.msra.mxu0 0
      %260 = vmatprep.subr.bf16.mxu0 0
      %261 = vmatpush1.bf16.msra.mxu0 0
      %262 = vmatprep.subr.bf16.mxu0 0
      %263 = vmatpush1.bf16.msra.mxu0 0
      %264 = vmatprep.subr.bf16.mxu0 0
      %265 = vmatpush1.bf16.msra.mxu0 0
      %266 = vmatprep.subr.bf16.mxu0 0
      %267 = vmatpush1.bf16.msra.mxu0 0
      %268 = vmatprep.subr.bf16.mxu0 0
      %269 = vmatpush1.bf16.msra.mxu0 0
      %270 = vmatprep.subr.bf16.mxu0 0
      %271 = vmatpush1.bf16.msra.mxu0 0
      %272 = vmatprep.subr.bf16.mxu0 0
      %273 = vmatpush1.bf16.msra.mxu0 0
      %274 = vmatprep.subr.bf16.mxu0 0
      %275 = vmatpush1.bf16.msra.mxu0 0
      %276 = vmatprep.subr.bf16.mxu0 0
      %277 = vmatpush1.bf16.msra.mxu0 0
      %278 = vmatprep.subr.bf16.mxu0 0
      %279 = vmatpush1.bf16.msra.mxu0 0
      %280 = vmatprep.subr.bf16.mxu0 0
      %281 = vmatpush1.bf16.msra.mxu0 0
      %282 = vmatprep.subr.bf16.mxu0 0
      %283 = vmatpush1.bf16.msra.mxu0 0
      %284 = vmatprep.subr.bf16.mxu0 0
      %285 = vmatpush1.bf16.msra.mxu0 0
      %286 = vmatprep.subr.bf16.mxu0 0
      %287 = vmatpush1.bf16.msra.mxu0 0
      %288 = vmatprep.mubr.bf16.mxu0 0
      %289 = vmatmul.mubr.bf16.gmra.mrb[0].mxu0 %v250
      %v290 = vpop.f32.mrb[0].mxu0
      %v291 = vadd.f32 0.0, %v290
      %v292 = vpop.f32.mrb[0].mxu0
      %v293 = vpop.f32.mrb[0].mxu0
      %v294 = vpop.f32.mrb[0].mxu0
      %295 = vdwg.mxu0
      %v297 = vsel %vm248, %v245, 0
      %v300 = vsel %vm252, %v242, 0
      %302 = vmatprep.subr.bf16.mxu0 0
      %303 = vmatpush1.bf16.msra.mxu0 %v300
      %304 = vmatprep.subr.bf16.mxu0 0
      %305 = vmatpush1.bf16.msra.mxu0 0
      %306 = vmatprep.subr.bf16.mxu0 0
      %307 = vmatpush1.bf16.msra.mxu0 0
      %308 = vmatprep.subr.bf16.mxu0 0
      %309 = vmatpush1.bf16.msra.mxu0 0
      %310 = vmatprep.subr.bf16.mxu0 0
      %311 = vmatpush1.bf16.msra.mxu0 0
      %312 = vmatprep.subr.bf16.mxu0 0
      %313 = vmatpush1.bf16.msra.mxu0 0
      %314 = vmatprep.subr.bf16.mxu0 0
      %315 = vmatpush1.bf16.msra.mxu0 0
      %316 = vmatprep.subr.bf16.mxu0 0
      %317 = vmatpush1.bf16.msra.mxu0 0
      %318 = vmatprep.subr.bf16.mxu0 0
      %319 = vmatpush1.bf16.msra.mxu0 0
      %320 = vmatprep.subr.bf16.mxu0 0
      %321 = vmatpush1.bf16.msra.mxu0 0
      %322 = vmatprep.subr.bf16.mxu0 0
      %323 = vmatpush1.bf16.msra.mxu0 0
      %324 = vmatprep.subr.bf16.mxu0 0
      %325 = vmatpush1.bf16.msra.mxu0 0
      %326 = vmatprep.subr.bf16.mxu0 0
      %327 = vmatpush1.bf16.msra.mxu0 0
      %328 = vmatprep.subr.bf16.mxu0 0
      %329 = vmatpush1.bf16.msra.mxu0 0
      %330 = vmatprep.subr.bf16.mxu0 0
      %331 = vmatpush1.bf16.msra.mxu0 0
      %332 = vmatprep.subr.bf16.mxu0 0
      %333 = vmatpush1.bf16.msra.mxu0 0
      %334 = vmatprep.mubr.bf16.mxu0 0
      %335 = vmatmul.mubr.bf16.gmra.mrb[0].mxu0 %v297
      %v336 = vpop.f32.mrb[0].mxu0
      %v337 = vadd.f32 %v291, %v336
      %v338 = vpop.f32.mrb[0].mxu0
      %v339 = vpop.f32.mrb[0].mxu0
      %v340 = vpop.f32.mrb[0].mxu0
      %341 = vdwg.mxu0
      %v343 = vlaneseq
      %v344 = vshrl.u32 %v343, 7
      %v345 = vsub.s32 0, %v344
      %v346 = vrot.slane %v244, %v345
      %v348 = vadd.f32 %v337, %v346
      %v349 = vpack.c.bf16 %v241, %v241
      %v350 = vsub.f32 %v241, %v240
      %v351 = vpack.c.bf16 %v350, %v350
      %v353 = vsel %vm248, %v351, 0
      %355 = vmatprep.subr.bf16.mxu0 0
      %356 = vmatpush1.bf16.msra.mxu0 %v254
      %357 = vmatprep.subr.bf16.mxu0 0
      %358 = vmatpush1.bf16.msra.mxu0 0
      %359 = vmatprep.subr.bf16.mxu0 0
      %360 = vmatpush1.bf16.msra.mxu0 0
      %361 = vmatprep.subr.bf16.mxu0 0
      %362 = vmatpush1.bf16.msra.mxu0 0
      %363 = vmatprep.subr.bf16.mxu0 0
      %364 = vmatpush1.bf16.msra.mxu0 0
      %365 = vmatprep.subr.bf16.mxu0 0
      %366 = vmatpush1.bf16.msra.mxu0 0
      %367 = vmatprep.subr.bf16.mxu0 0
      %368 = vmatpush1.bf16.msra.mxu0 0
      %369 = vmatprep.subr.bf16.mxu0 0
      %370 = vmatpush1.bf16.msra.mxu0 0
      %371 = vmatprep.subr.bf16.mxu0 0
      %372 = vmatpush1.bf16.msra.mxu0 0
      %373 = vmatprep.subr.bf16.mxu0 0
      %374 = vmatpush1.bf16.msra.mxu0 0
      %375 = vmatprep.subr.bf16.mxu0 0
      %376 = vmatpush1.bf16.msra.mxu0 0
      %377 = vmatprep.subr.bf16.mxu0 0
      %378 = vmatpush1.bf16.msra.mxu0 0
      %379 = vmatprep.subr.bf16.mxu0 0
      %380 = vmatpush1.bf16.msra.mxu0 0
      %381 = vmatprep.subr.bf16.mxu0 0
      %382 = vmatpush1.bf16.msra.mxu0 0
      %383 = vmatprep.subr.bf16.mxu0 0
      %384 = vmatpush1.bf16.msra.mxu0 0
      %385 = vmatprep.subr.bf16.mxu0 0
      %386 = vmatpush1.bf16.msra.mxu0 0
      %387 = vmatprep.mubr.bf16.mxu0 0
      %388 = vmatmul.mubr.bf16.gmra.mrb[0].mxu0 %v353
      %v389 = vpop.f32.mrb[0].mxu0
      %v390 = vadd.f32 0.0, %v389
      %v391 = vpop.f32.mrb[0].mxu0
      %v392 = vpop.f32.mrb[0].mxu0
      %v393 = vpop.f32.mrb[0].mxu0
      %394 = vdwg.mxu0
      %v396 = vsel %vm248, %v349, 0
      %398 = vmatprep.subr.bf16.mxu0 0
      %399 = vmatpush1.bf16.msra.mxu0 %v300
      %400 = vmatprep.subr.bf16.mxu0 0
      %401 = vmatpush1.bf16.msra.mxu0 0
      %402 = vmatprep.subr.bf16.mxu0 0
      %403 = vmatpush1.bf16.msra.mxu0 0
      %404 = vmatprep.subr.bf16.mxu0 0
      %405 = vmatpush1.bf16.msra.mxu0 0
      %406 = vmatprep.subr.bf16.mxu0 0
      %407 = vmatpush1.bf16.msra.mxu0 0
      %408 = vmatprep.subr.bf16.mxu0 0
      %409 = vmatpush1.bf16.msra.mxu0 0
      %410 = vmatprep.subr.bf16.mxu0 0
      %411 = vmatpush1.bf16.msra.mxu0 0
      %412 = vmatprep.subr.bf16.mxu0 0
      %413 = vmatpush1.bf16.msra.mxu0 0
      %414 = vmatprep.subr.bf16.mxu0 0
      %415 = vmatpush1.bf16.msra.mxu0 0
      %416 = vmatprep.subr.bf16.mxu0 0
      %417 = vmatpush1.bf16.msra.mxu0 0
      %418 = vmatprep.subr.bf16.mxu0 0
      %419 = vmatpush1.bf16.msra.mxu0 0
      %420 = vmatprep.subr.bf16.mxu0 0
      %421 = vmatpush1.bf16.msra.mxu0 0
      %422 = vmatprep.subr.bf16.mxu0 0
      %423 = vmatpush1.bf16.msra.mxu0 0
      %424 = vmatprep.subr.bf16.mxu0 0
      %425 = vmatpush1.bf16.msra.mxu0 0
      %426 = vmatprep.subr.bf16.mxu0 0
      %427 = vmatpush1.bf16.msra.mxu0 0
      %428 = vmatprep.subr.bf16.mxu0 0
      %429 = vmatpush1.bf16.msra.mxu0 0
      %430 = vmatprep.mubr.bf16.mxu0 0
      %431 = vmatmul.mubr.bf16.gmra.mrb[0].mxu0 %v396
      %v432 = vpop.f32.mrb[0].mxu0
      %v433 = vadd.f32 %v390, %v432
      %v434 = vpop.f32.mrb[0].mxu0
      %v435 = vpop.f32.mrb[0].mxu0
      %v436 = vpop.f32.mrb[0].mxu0
      %437 = vdwg.mxu0
      %v438 = vadd.f32 %v433, %v346
      %vm439 = vcmask 23552
      %440 = vst.msk [vmem:[%s238] sm:$0xff] %vm439, %v348
      %441 = vst.msk [vmem:[%s238 + $0x8] sm:$0xff] %vm439, %v438
      %p442 = scmp.lt.s32.totalorder %s16, 1
      %s443 = scalar_select %p442, %s16, 1
      %s444 = smul.addr %s443, 2
      %s445 = smul.addr %s444, 8
      %s446 = scalar_lea.vmem %s5, %s445
      // Predicated region
      $region41: #{spec2dcnn_2day_v2_forward.5} parent=39 // pred_check
        %p447 = pneg %p149
      $region42: #{spec2dcnn_2day_v2_forward.5} parent=39 // pred_check_branch
        %449 = sbr.rel (%p447) target = $region44
      $region43: #{spec2dcnn_2day_v2_forward.5} parent=39 // pred_region
        _
      $region44: #{spec2dcnn_2day_v2_forward.5} parent=39 // pred_fallthru
        _
    $region40: #{spec2dcnn_2day_v2_forward.5} parent=5 // pred_fallthru
      _
    %p450 = scmp.le.s32.totalorder 2, %s11
    // Predicated region
    $region45: #{spec2dcnn_2day_v2_forward.5} parent=5 // pred_check
      %p451 = pneg %p450
    $region46: #{spec2dcnn_2day_v2_forward.5} parent=5 // pred_check_branch
      %453 = sbr.rel (%p451) target = $region48
    $region47: #{spec2dcnn_2day_v2_forward.5} parent=5 // pred_region
      %s454 = ssub.s32 %s11, 2
      // Predicated region
      $region49: #{spec2dcnn_2day_v2_forward.5} parent=47 // pred_check
        %p455 = pneg %p155
      $region50: #{spec2dcnn_2day_v2_forward.5} parent=47 // pred_check_branch
        %457 = sbr.rel (%p455) target = $region52
      $region51: #{spec2dcnn_2day_v2_forward.5} parent=47 // pred_region
        %p458 = scmp.lt.s32.totalorder %s17, 1
        %s459 = scalar_select %p458, %s17, 1
        %s460 = smul.addr %s459, 2
        %s461 = smul.addr %s460, 8
        %s462 = scalar_lea.vmem %s5, %s461
      $region52: #{spec2dcnn_2day_v2_forward.5} parent=47 // pred_fallthru
        _
    $region48: #{spec2dcnn_2day_v2_forward.5} parent=5 // pred_fallthru
      _
  $region6: #{spec2dcnn_2day_v2_forward.5} parent=0 // loop_footer
    %s15 = sadd.s32 1, %s11
  $region7: #{spec2dcnn_2day_v2_forward.5} parent=0 // loop_footer_branch
    %10 = sbr.rel target = $region3
  $region8: #{spec2dcnn_2day_v2_forward.5} parent=0 // loop_exit
    _

// kernel: spec2dcnn_2day_v2_forward.4
$region0: #{spec2dcnn_2day_v2_forward.4}
  #allocation0 [shape = 'u32[]', space=smem, size = 0x4, offset = 0x4, fixed_abs, tag = 'smem constant byte address 0x4 - core index']
  #allocation1 [shape = 'u32[144,128]{1,0:T(1,128)}', space=vmem, size = 0x12000, scoped, tag = 'internal scratch']
  #allocation2 [shape = 'f32[10,32]{1,0:T(8,128)}', space=vmem, size = 0x2000, scoped, tag = 'scratch operand']
  #allocation3 [shape = 'f32[10,128]{1,0:T(8,128)}', space=vmem, size = 0x2000, scoped, tag = 'scratch operand']
  %s0 = inlined_call_operand.vmem [shape: bf16[4,8,32], index: 0, kind: input, shape index: {}]
  %s1 = inlined_call_operand.vmem [shape: bf16[3,32,128], index: 1, kind: input, shape index: {}]
  %s2 = inlined_call_operand.vmem [shape: f32[1,128], index: 2, kind: input, shape index: {}]
  %s3 = inlined_call_operand.vmem [shape: bf16[3,128,128], index: 3, kind: input, shape index: {}]
  %s4 = inlined_call_operand.vmem [shape: f32[1,128], index: 4, kind: input, shape index: {}]
  %s5 = inlined_call_operand.vmem [shape: bf16[128,8], index: 5, kind: input, shape index: {}]
  %s6 = inlined_call_operand.vmem [shape: f32[1,8], index: 6, kind: input, shape index: {}]
  %s7 = inlined_call_operand.vmem [shape: f32[4,8,8], index: 7, kind: output, shape index: {}]
  %s8 = sld [smem:[#allocation0]]
  $region61: #{spec2dcnn_2day_v2_forward.4} parent=0
    _
  %s10 = ssub.s32 1, %s8
  %s11 = scalar_select 0, %s10, %s8
  loop: start=0, step=1, limit=6
  $region2: #{spec2dcnn_2day_v2_forward.4} parent=0 // loop_pre_header
    _
  $region3: #{spec2dcnn_2day_v2_forward.4} parent=0 // loop_header
    %s13 = sphi 0, %s17
    %p14 = scmp.ge.s32.totalorder %s13, 6
    %s23 = sphi 0, %s25
    %s26 = sphi 0, %s23
    %s27 = sphi 0, %s26
    %s43 = sphi 0, %s27
    %s47 = sphi 0, %s47
    %s49 = sphi 0, %s47
    %s50 = sphi 0, %s49
    %s64 = sphi 0, %s50
    %s68 = sphi 0, %s68
    %s70 = sphi 0, %s68
    %s71 = sphi 0, %s70
    %s85 = sphi 0, %s71
    %s89 = sphi 0, %s89
    %s91 = sphi 0, %s89
    %s92 = sphi 0, %s91
    %s106 = sphi 0, %s92
    %s110 = sphi 0, %s110
    %s112 = sphi 0, %s110
    %s113 = sphi 0, %s112
    %s127 = sphi 0, %s113
    %s131 = sphi 0, %s131
    %s133 = sphi 0, %s131
    %s134 = sphi 0, %s133
    %s148 = sphi 0, %s134
    %s152 = sphi 0, %s152
    %s154 = sphi 0, %s152
    %s155 = sphi 0, %s154
    %s169 = sphi 0, %s155
    %s175 = sphi 0, %s177
    %s178 = sphi 0, %s175
    %s179 = sphi 0, %s178
    %s195 = sphi 0, %s179
  $region4: #{spec2dcnn_2day_v2_forward.4} parent=0 // loop_header_branch
    %16 = sbr.rel (%p14) target = $region8
  $region5: #{spec2dcnn_2day_v2_forward.4} parent=0 // loop_body
    %s18 = ssub.s32 %s13, 1
    %s19 = ssub.s32 %s13, 2
    %s20 = sadd.s32 %s13, 1
    %s21 = ssub.s32 %s13, %s20
    %p22 = scmp.eq.s32.totalorder %s21, 0
    %s24 = sadd.s32 %s23, 1
    %s25 = scalar_select %p22, %s23, %s24
    %p28 = pneg %p22
    %p29 = scmp.eq.s32.totalorder %s13, 3
    %p30 = por %p28, %p29
    %p31 = scmp.ne.s32.totalorder %s23, %s26
    %p32 = scmp.eq.s32.totalorder %s13, 0
    %p33 = por %p31, %p32
    %p34 = scmp.ne.s32.totalorder %s23, %s26
    %p35 = scmp.eq.s32.totalorder %s18, 3
    %p36 = por %p34, %p35
    %p37 = scmp.ne.s32.totalorder %s26, %s27
    %p38 = scmp.eq.s32.totalorder %s18, 0
    %p39 = por %p37, %p38
    %p40 = scmp.ne.s32.totalorder %s26, %s27
    %p41 = scmp.eq.s32.totalorder %s19, 3
    %p42 = por %p40, %p41
    %p44 = scmp.ne.s32.totalorder %s27, %s43
    %p45 = scmp.eq.s32.totalorder %s19, 0
    %p46 = por %p44, %p45
    %s48 = sadd.s32 %s47, 1
    %p51 = scmp.eq.s32.totalorder %s13, 3
    %p52 = scmp.ne.s32.totalorder %s47, %s49
    %p53 = scmp.eq.s32.totalorder %s13, 0
    %p54 = por %p52, %p53
    %p55 = scmp.ne.s32.totalorder %s47, %s49
    %p56 = scmp.eq.s32.totalorder %s18, 3
    %p57 = por %p55, %p56
    %p58 = scmp.ne.s32.totalorder %s49, %s50
    %p59 = scmp.eq.s32.totalorder %s18, 0
    %p60 = por %p58, %p59
    %p61 = scmp.ne.s32.totalorder %s49, %s50
    %p62 = scmp.eq.s32.totalorder %s19, 3
    %p63 = por %p61, %p62
    %p65 = scmp.ne.s32.totalorder %s50, %s64
    %p66 = scmp.eq.s32.totalorder %s19, 0
    %p67 = por %p65, %p66
    %s69 = sadd.s32 %s68, 1
    %p72 = scmp.eq.s32.totalorder %s13, 3
    %p73 = scmp.ne.s32.totalorder %s68, %s70
    %p74 = scmp.eq.s32.totalorder %s13, 0
    %p75 = por %p73, %p74
    %p76 = scmp.ne.s32.totalorder %s68, %s70
    %p77 = scmp.eq.s32.totalorder %s18, 3
    %p78 = por %p76, %p77
    %p79 = scmp.ne.s32.totalorder %s70, %s71
    %p80 = scmp.eq.s32.totalorder %s18, 0
    %p81 = por %p79, %p80
    %p82 = scmp.ne.s32.totalorder %s70, %s71
    %p83 = scmp.eq.s32.totalorder %s19, 3
    %p84 = por %p82, %p83
    %p86 = scmp.ne.s32.totalorder %s71, %s85
    %p87 = scmp.eq.s32.totalorder %s19, 0
    %p88 = por %p86, %p87
    %s90 = sadd.s32 %s89, 1
    %p93 = scmp.eq.s32.totalorder %s13, 3
    %p94 = scmp.ne.s32.totalorder %s89, %s91
    %p95 = scmp.eq.s32.totalorder %s13, 0
    %p96 = por %p94, %p95
    %p97 = scmp.ne.s32.totalorder %s89, %s91
    %p98 = scmp.eq.s32.totalorder %s18, 3
    %p99 = por %p97, %p98
    %p100 = scmp.ne.s32.totalorder %s91, %s92
    %p101 = scmp.eq.s32.totalorder %s18, 0
    %p102 = por %p100, %p101
    %p103 = scmp.ne.s32.totalorder %s91, %s92
    %p104 = scmp.eq.s32.totalorder %s19, 3
    %p105 = por %p103, %p104
    %p107 = scmp.ne.s32.totalorder %s92, %s106
    %p108 = scmp.eq.s32.totalorder %s19, 0
    %p109 = por %p107, %p108
    %s111 = sadd.s32 %s110, 1
    %p114 = scmp.eq.s32.totalorder %s13, 3
    %p115 = scmp.ne.s32.totalorder %s110, %s112
    %p116 = scmp.eq.s32.totalorder %s13, 0
    %p117 = por %p115, %p116
    %p118 = scmp.ne.s32.totalorder %s110, %s112
    %p119 = scmp.eq.s32.totalorder %s18, 3
    %p120 = por %p118, %p119
    %p121 = scmp.ne.s32.totalorder %s112, %s113
    %p122 = scmp.eq.s32.totalorder %s18, 0
    %p123 = por %p121, %p122
    %p124 = scmp.ne.s32.totalorder %s112, %s113
    %p125 = scmp.eq.s32.totalorder %s19, 3
    %p126 = por %p124, %p125
    %p128 = scmp.ne.s32.totalorder %s113, %s127
    %p129 = scmp.eq.s32.totalorder %s19, 0
    %p130 = por %p128, %p129
    %s132 = sadd.s32 %s131, 1
    %p135 = scmp.eq.s32.totalorder %s13, 3
    %p136 = scmp.ne.s32.totalorder %s131, %s133
    %p137 = scmp.eq.s32.totalorder %s13, 0
    %p138 = por %p136, %p137
    %p139 = scmp.ne.s32.totalorder %s131, %s133
    %p140 = scmp.eq.s32.totalorder %s18, 3
    %p141 = por %p139, %p140
    %p142 = scmp.ne.s32.totalorder %s133, %s134
    %p143 = scmp.eq.s32.totalorder %s18, 0
    %p144 = por %p142, %p143
    %p145 = scmp.ne.s32.totalorder %s133, %s134
    %p146 = scmp.eq.s32.totalorder %s19, 3
    %p147 = por %p145, %p146
    %p149 = scmp.ne.s32.totalorder %s134, %s148
    %p150 = scmp.eq.s32.totalorder %s19, 0
    %p151 = por %p149, %p150
    %s153 = sadd.s32 %s152, 1
    %p156 = scmp.eq.s32.totalorder %s13, 3
    %p157 = scmp.ne.s32.totalorder %s152, %s154
    %p158 = scmp.eq.s32.totalorder %s13, 0
    %p159 = por %p157, %p158
    %p160 = scmp.ne.s32.totalorder %s152, %s154
    %p161 = scmp.eq.s32.totalorder %s18, 3
    %p162 = por %p160, %p161
    %p163 = scmp.ne.s32.totalorder %s154, %s155
    %p164 = scmp.eq.s32.totalorder %s18, 0
    %p165 = por %p163, %p164
    %p166 = scmp.ne.s32.totalorder %s154, %s155
    %p167 = scmp.eq.s32.totalorder %s19, 3
    %p168 = por %p166, %p167
    %p170 = scmp.ne.s32.totalorder %s155, %s169
    %p171 = scmp.eq.s32.totalorder %s19, 0
    %p172 = por %p170, %p171
    %s173 = ssub.s32 %s13, %s20
    %p174 = scmp.eq.s32.totalorder %s173, 0
    %s176 = sadd.s32 %s175, 1
    %s177 = scalar_select %p174, %s175, %s176
    %p180 = pneg %p174
    %p181 = scmp.eq.s32.totalorder %s13, 3
    %p182 = por %p180, %p181
    %p183 = scmp.ne.s32.totalorder %s175, %s178
    %p184 = scmp.eq.s32.totalorder %s13, 0
    %p185 = por %p183, %p184
    %p186 = scmp.ne.s32.totalorder %s175, %s178
    %p187 = scmp.eq.s32.totalorder %s18, 3
    %p188 = por %p186, %p187
    %p189 = scmp.ne.s32.totalorder %s178, %s179
    %p190 = scmp.eq.s32.totalorder %s18, 0
    %p191 = por %p189, %p190
    %p192 = scmp.ne.s32.totalorder %s178, %s179
    %p193 = scmp.eq.s32.totalorder %s19, 3
    %p194 = por %p192, %p193
    %p196 = scmp.ne.s32.totalorder %s179, %s195
    %p197 = scmp.eq.s32.totalorder %s19, 0
    %p198 = por %p196, %p197
    %p199 = scmp.le.s32.totalorder 1, %s13
    %p200 = scmp.lt.s32.totalorder %s13, 5
    %p201 = pnand %p199, %p200
    %p202 = pneg %p201
    // Predicated region
    $region9: #{spec2dcnn_2day_v2_forward.4} parent=5 // pred_check
      _
    $region10: #{spec2dcnn_2day_v2_forward.4} parent=5 // pred_check_branch
      %204 = sbr.rel (%p201) target = $region12
    $region11: #{spec2dcnn_2day_v2_forward.4} parent=5 // pred_region
      %s205 = ssub.s32 %s13, 1
      // Predicated region
      $region13: #{spec2dcnn_2day_v2_forward.4} parent=11 // pred_check
        %p206 = pneg %p60
      $region14: #{spec2dcnn_2day_v2_forward.4} parent=11 // pred_check_branch
        %208 = sbr.rel (%p206) target = $region16
      $region15: #{spec2dcnn_2day_v2_forward.4} parent=11 // pred_region
        _
      $region16: #{spec2dcnn_2day_v2_forward.4} parent=11 // pred_fallthru
        _
      // Predicated region
      $region17: #{spec2dcnn_2day_v2_forward.4} parent=11 // pred_check
        %p209 = pneg %p81
      $region18: #{spec2dcnn_2day_v2_forward.4} parent=11 // pred_check_branch
        %211 = sbr.rel (%p209) target = $region20
      $region19: #{spec2dcnn_2day_v2_forward.4} parent=11 // pred_region
        _
      $region20: #{spec2dcnn_2day_v2_forward.4} parent=11 // pred_fallthru
        _
      // Predicated region
      $region21: #{spec2dcnn_2day_v2_forward.4} parent=11 // pred_check
        %p212 = pneg %p102
      $region22: #{spec2dcnn_2day_v2_forward.4} parent=11 // pred_check_branch
        %214 = sbr.rel (%p212) target = $region24
      $region23: #{spec2dcnn_2day_v2_forward.4} parent=11 // pred_region
        _
      $region24: #{spec2dcnn_2day_v2_forward.4} parent=11 // pred_fallthru
        _
      // Predicated region
      $region25: #{spec2dcnn_2day_v2_forward.4} parent=11 // pred_check
        %p215 = pneg %p123
      $region26: #{spec2dcnn_2day_v2_forward.4} parent=11 // pred_check_branch
        %217 = sbr.rel (%p215) target = $region28
      $region27: #{spec2dcnn_2day_v2_forward.4} parent=11 // pred_region
        _
      $region28: #{spec2dcnn_2day_v2_forward.4} parent=11 // pred_fallthru
        _
      // Predicated region
      $region29: #{spec2dcnn_2day_v2_forward.4} parent=11 // pred_check
        %p218 = pneg %p144
      $region30: #{spec2dcnn_2day_v2_forward.4} parent=11 // pred_check_branch
        %220 = sbr.rel (%p218) target = $region32
      $region31: #{spec2dcnn_2day_v2_forward.4} parent=11 // pred_region
        _
      $region32: #{spec2dcnn_2day_v2_forward.4} parent=11 // pred_fallthru
        _
      // Predicated region
      $region33: #{spec2dcnn_2day_v2_forward.4} parent=11 // pred_check
        %p221 = pneg %p165
      $region34: #{spec2dcnn_2day_v2_forward.4} parent=11 // pred_check_branch
        %223 = sbr.rel (%p221) target = $region36
      $region35: #{spec2dcnn_2day_v2_forward.4} parent=11 // pred_region
        _
      $region36: #{spec2dcnn_2day_v2_forward.4} parent=11 // pred_fallthru
        _
    $region12: #{spec2dcnn_2day_v2_forward.4} parent=5 // pred_fallthru
      _
    %p224 = scmp.lt.s32.totalorder %s13, 4
    // Predicated region
    $region37: #{spec2dcnn_2day_v2_forward.4} parent=5 // pred_check
      %p225 = pneg %p224
    $region38: #{spec2dcnn_2day_v2_forward.4} parent=5 // pred_check_branch
      %227 = sbr.rel (%p225) target = $region40
    $region39: #{spec2dcnn_2day_v2_forward.4} parent=5 // pred_region
      // Predicated region
      $region41: #{spec2dcnn_2day_v2_forward.4} parent=39 // pred_check
        %p228 = pneg %p33
      $region42: #{spec2dcnn_2day_v2_forward.4} parent=39 // pred_check_branch
        %230 = sbr.rel (%p228) target = $region44
      $region43: #{spec2dcnn_2day_v2_forward.4} parent=39 // pred_region
        %p231 = scmp.lt.s32.totalorder %s13, 3
        %s232 = scalar_select %p231, %s13, 3
        %s233 = smul.addr %s232, 4
        %s234 = scalar_lea.vmem %s0, %s233
      $region44: #{spec2dcnn_2day_v2_forward.4} parent=39 // pred_fallthru
        _
    $region40: #{spec2dcnn_2day_v2_forward.4} parent=5 // pred_fallthru
      _
    %p235 = scmp.le.s32.totalorder 1, %s13
    %p236 = scmp.lt.s32.totalorder %s13, 5
    %p237 = pnand %p235, %p236
    %p238 = pneg %p237
    // Predicated region
    $region45: #{spec2dcnn_2day_v2_forward.4} parent=5 // pred_check
      _
    $region46: #{spec2dcnn_2day_v2_forward.4} parent=5 // pred_check_branch
      %240 = sbr.rel (%p237) target = $region48
    $region47: #{spec2dcnn_2day_v2_forward.4} parent=5 // pred_region
      %s241 = ssub.s32 %s13, 1
      %p242 = scmp.lt.s32.totalorder %s18, 3
      %s243 = scalar_select %p242, %s18, 3
      %s244 = smul.addr %s243, 4
      %s245 = scalar_lea.vmem %s0, %s244
      %p246 = pneg %p39
      %p247 = pneg %p36
      %p248 = pneg %p60
      %p249 = pneg %p57
      %p250 = pneg %p81
      %p251 = pneg %p78
      %p252 = pneg %p102
      %p253 = pneg %p99
      %p254 = pneg %p123
      %p255 = pneg %p120
      %p256 = pneg %p144
      %p257 = pneg %p141
      %p258 = pneg %p165
      %p259 = pneg %p162
      %p260 = pneg %p191
      %p261 = pneg %p188
      %p262 = scmp.lt.s32.totalorder %s18, 3
      %s263 = scalar_select %p262, %s18, 3
      %s264 = smul.addr %s263, 8
      %s265 = scalar_lea.vmem %s7, %s264
      %p266 = scmp.lt.s32.totalorder %s18, 3
      %s267 = scalar_select %p266, %s18, 3
      %s268 = smul.addr %s267, 4
      %s269 = scalar_lea.vmem %s0, %s268
      %p270 = scmp.lt.s32.totalorder %s18, 3
      %s271 = scalar_select %p270, %s18, 3
      %s272 = smul.addr %s271, 8
      %s273 = scalar_lea.vmem %s7, %s272
      %vm275 = vcmask 253952
      %276 = vst.msk [vmem:[#allocation2] sm:$0x1] %vm275, 0.0
      %277 = vst.msk [vmem:[#allocation2 + $0x9] sm:$0x1] %vm275, 0.0
      %v278 = vld [vmem:[%s269] sm:$0xf]
      %v279 = vunpack.c.l.bf16 %v278
      %vm280 = vcmask 261120
      %281 = vst.msk [vmem:[#allocation2 + $0x1] sm:$0xff] %vm280, %v279
      %v282 = vld [vmem:[#allocation2] sm:$0xff]
      %v283 = vpack.c.bf16 %v282, %v282
      %v284 = vld [vmem:[%s1] sm:$0xf]
      %v285 = vld [vmem:[%s1 + $0x4] sm:$0xf]
      %v286 = vld [vmem:[%s1 + $0x8] sm:$0xf]
      %v287 = vld [vmem:[%s1 + $0xc] sm:$0xf]
      %v288 = vld [vmem:[#allocation2 + $0x1] sm:$0xff]
      %v289 = vpack.c.bf16 %v288, %v288
      %s290 = scalar_lea.vmem %s1, 16
      %v291 = vld [vmem:[%s290] sm:$0xf]
      %v292 = vld [vmem:[%s290 + $0x4] sm:$0xf]
      %v293 = vld [vmem:[%s290 + $0x8] sm:$0xf]
      %v294 = vld [vmem:[%s290 + $0xc] sm:$0xf]
      %v299 = vunpack.c.l.b16 %v291
      %v300 = vunpack.c.l.b16 %v292
      %v301 = vunpack.c.l.b16 %v293
      %v302 = vunpack.c.l.b16 %v294
      %v303 = vpack.c.b16 %v300, %v299
      %v304 = vpack.c.b16 %v302, %v301
      %v308 = vsel %vm280, %v289, 0
      %310 = vmatprep.subr.bf16.mxu0 0
      %311 = vmatpush1.bf16.msra.mxu0 %v303
      %312 = vmatprep.subr.bf16.mxu0 0
      %313 = vmatpush1.bf16.msra.mxu0 %v304
      %314 = vmatprep.subr.bf16.mxu0 0
      %315 = vmatpush1.bf16.msra.mxu0 0
      %316 = vmatprep.subr.bf16.mxu0 0
      %317 = vmatpush1.bf16.msra.mxu0 0
      %318 = vmatprep.subr.bf16.mxu0 0
      %319 = vmatpush1.bf16.msra.mxu0 0
      %320 = vmatprep.subr.bf16.mxu0 0
      %321 = vmatpush1.bf16.msra.mxu0 0
      %322 = vmatprep.subr.bf16.mxu0 0
      %323 = vmatpush1.bf16.msra.mxu0 0
      %324 = vmatprep.subr.bf16.mxu0 0
      %325 = vmatpush1.bf16.msra.mxu0 0
      %326 = vmatprep.subr.bf16.mxu0 0
      %327 = vmatpush1.bf16.msra.mxu0 0
      %328 = vmatprep.subr.bf16.mxu0 0
      %329 = vmatpush1.bf16.msra.mxu0 0
      %330 = vmatprep.subr.bf16.mxu0 0
      %331 = vmatpush1.bf16.msra.mxu0 0
      %332 = vmatprep.subr.bf16.mxu0 0
      %333 = vmatpush1.bf16.msra.mxu0 0
      %334 = vmatprep.subr.bf16.mxu0 0
      %335 = vmatpush1.bf16.msra.mxu0 0
      %336 = vmatprep.subr.bf16.mxu0 0
      %337 = vmatpush1.bf16.msra.mxu0 0
      %338 = vmatprep.subr.bf16.mxu0 0
      %339 = vmatpush1.bf16.msra.mxu0 0
      %340 = vmatprep.subr.bf16.mxu0 0
      %341 = vmatpush1.bf16.msra.mxu0 0
      %342 = vmatprep.mubr.bf16.mxu0 0
      %343 = vmatmul.mubr.bf16.gmra.mrb[0].mxu0 %v308
      %v344 = vpop.f32.mrb[0].mxu0
      %v345 = vadd.f32 0.0, %v344
      %v346 = vpop.f32.mrb[0].mxu0
      %v347 = vpop.f32.mrb[0].mxu0
      %v348 = vpop.f32.mrb[0].mxu0
      %349 = vdwg.mxu0
      %v354 = vunpack.c.l.b16 %v284
      %v355 = vunpack.c.l.b16 %v285
      %v356 = vunpack.c.l.b16 %v286
      %v357 = vunpack.c.l.b16 %v287
      %v358 = vpack.c.b16 %v355, %v354
      %v359 = vpack.c.b16 %v357, %v356
      %v363 = vsel %vm280, %v283, 0
      %365 = vmatprep.subr.bf16.mxu0 0
      %366 = vmatpush1.bf16.msra.mxu0 %v358
      %367 = vmatprep.subr.bf16.mxu0 0
      %368 = vmatpush1.bf16.msra.mxu0 %v359
      %369 = vmatprep.subr.bf16.mxu0 0
      %370 = vmatpush1.bf16.msra.mxu0 0
      %371 = vmatprep.subr.bf16.mxu0 0
      %372 = vmatpush1.bf16.msra.mxu0 0
      %373 = vmatprep.subr.bf16.mxu0 0
      %374 = vmatpush1.bf16.msra.mxu0 0
      %375 = vmatprep.subr.bf16.mxu0 0
      %376 = vmatpush1.bf16.msra.mxu0 0
      %377 = vmatprep.subr.bf16.mxu0 0
      %378 = vmatpush1.bf16.msra.mxu0 0
      %379 = vmatprep.subr.bf16.mxu0 0
      %380 = vmatpush1.bf16.msra.mxu0 0
      %381 = vmatprep.subr.bf16.mxu0 0
      %382 = vmatpush1.bf16.msra.mxu0 0
      %383 = vmatprep.subr.bf16.mxu0 0
      %384 = vmatpush1.bf16.msra.mxu0 0
      %385 = vmatprep.subr.bf16.mxu0 0
      %386 = vmatpush1.bf16.msra.mxu0 0
      %387 = vmatprep.subr.bf16.mxu0 0
      %388 = vmatpush1.bf16.msra.mxu0 0
      %389 = vmatprep.subr.bf16.mxu0 0
      %390 = vmatpush1.bf16.msra.mxu0 0
      %391 = vmatprep.subr.bf16.mxu0 0
      %392 = vmatpush1.bf16.msra.mxu0 0
      %393 = vmatprep.subr.bf16.mxu0 0
      %394 = vmatpush1.bf16.msra.mxu0 0
      %395 = vmatprep.subr.bf16.mxu0 0
      %396 = vmatpush1.bf16.msra.mxu0 0
      %397 = vmatprep.mubr.bf16.mxu0 0
      %398 = vmatmul.mubr.bf16.gmra.mrb[0].mxu0 %v363
      %v399 = vpop.f32.mrb[0].mxu0
      %v400 = vadd.f32 %v345, %v399
      %v401 = vpop.f32.mrb[0].mxu0
      %v402 = vpop.f32.mrb[0].mxu0
      %v403 = vpop.f32.mrb[0].mxu0
      %404 = vdwg.mxu0
      %v405 = vld [vmem:[#allocation2 + $0x2] sm:$0xff]
      %v406 = vpack.c.bf16 %v405, %v405
      %s407 = scalar_lea.vmem %s1, 32
      %v408 = vld [vmem:[%s407] sm:$0xf]
      %v409 = vld [vmem:[%s407 + $0x4] sm:$0xf]
      %v410 = vld [vmem:[%s407 + $0x8] sm:$0xf]
      %v411 = vld [vmem:[%s407 + $0xc] sm:$0xf]
      %v416 = vunpack.c.l.b16 %v408
      %v417 = vunpack.c.l.b16 %v409
      %v418 = vunpack.c.l.b16 %v410
      %v419 = vunpack.c.l.b16 %v411
      %v420 = vpack.c.b16 %v417, %v416
      %v421 = vpack.c.b16 %v419, %v418
      %v425 = vsel %vm280, %v406, 0
      %427 = vmatprep.subr.bf16.mxu0 0
      %428 = vmatpush1.bf16.msra.mxu0 %v420
      %429 = vmatprep.subr.bf16.mxu0 0
      %430 = vmatpush1.bf16.msra.mxu0 %v421
      %431 = vmatprep.subr.bf16.mxu0 0
      %432 = vmatpush1.bf16.msra.mxu0 0
      %433 = vmatprep.subr.bf16.mxu0 0
      %434 = vmatpush1.bf16.msra.mxu0 0
      %435 = vmatprep.subr.bf16.mxu0 0
      %436 = vmatpush1.bf16.msra.mxu0 0
      %437 = vmatprep.subr.bf16.mxu0 0
      %438 = vmatpush1.bf16.msra.mxu0 0
      %439 = vmatprep.subr.bf16.mxu0 0
      %440 = vmatpush1.bf16.msra.mxu0 0
      %441 = vmatprep.subr.bf16.mxu0 0
      %442 = vmatpush1.bf16.msra.mxu0 0
      %443 = vmatprep.subr.bf16.mxu0 0
      %444 = vmatpush1.bf16.msra.mxu0 0
      %445 = vmatprep.subr.bf16.mxu0 0
      %446 = vmatpush1.bf16.msra.mxu0 0
      %447 = vmatprep.subr.bf16.mxu0 0
      %448 = vmatpush1.bf16.msra.mxu0 0
      %449 = vmatprep.subr.bf16.mxu0 0
      %450 = vmatpush1.bf16.msra.mxu0 0
      %451 = vmatprep.subr.bf16.mxu0 0
      %452 = vmatpush1.bf16.msra.mxu0 0
      %453 = vmatprep.subr.bf16.mxu0 0
      %454 = vmatpush1.bf16.msra.mxu0 0
      %455 = vmatprep.subr.bf16.mxu0 0
      %456 = vmatpush1.bf16.msra.mxu0 0
      %457 = vmatprep.subr.bf16.mxu0 0
      %458 = vmatpush1.bf16.msra.mxu0 0
      %459 = vmatprep.mubr.bf16.mxu0 0
      %460 = vmatmul.mubr.bf16.gmra.mrb[0].mxu0 %v425
      %v461 = vpop.f32.mrb[0].mxu0
      %v462 = vadd.f32 0.0, %v461
      %v463 = vpop.f32.mrb[0].mxu0
      %v464 = vpop.f32.mrb[0].mxu0
      %v465 = vpop.f32.mrb[0].mxu0
      %466 = vdwg.mxu0
      %v467 = vadd.f32 %v400, %v462
      %v468 = vld [vmem:[%s2] sm:$0x1]
      %v470 = vlaneseq
      %v471 = vshrl.u32 %v470, 7
      %v472 = vsub.s32 0, %v471
      %v473 = vrot.slane %v468, %v472
      %v475 = vadd.f32 %v467, %v473
      %v476 = vmax.f32 %v475, 0.0
      %477 = vst [vmem:[#allocation3] sm:$0x1] 0.0
      %478 = vst [vmem:[#allocation3 + $0x9] sm:$0x1] 0.0
      %479 = vst [vmem:[#allocation3 + $0x1] sm:$0xff] %v476
      %v480 = vld [vmem:[#allocation3] sm:$0xff]
      %v481 = vpack.c.bf16 %v480, %v480
      %v482 = vld [vmem:[%s3] sm:$0xf]
      %v483 = vld [vmem:[%s3 + $0x4] sm:$0xf]
      %v484 = vld [vmem:[%s3 + $0x8] sm:$0xf]
      %v485 = vld [vmem:[%s3 + $0xc] sm:$0xf]
      %v486 = vld [vmem:[%s3 + $0x10] sm:$0xf]
      %v487 = vld [vmem:[%s3 + $0x14] sm:$0xf]
      %v488 = vld [vmem:[%s3 + $0x18] sm:$0xf]
      %v489 = vld [vmem:[%s3 + $0x1c] sm:$0xf]
      %v490 = vld [vmem:[%s3 + $0x20] sm:$0xf]
      %v491 = vld [vmem:[%s3 + $0x24] sm:$0xf]
      %v492 = vld [vmem:[%s3 + $0x28] sm:$0xf]
      %v493 = vld [vmem:[%s3 + $0x2c] sm:$0xf]
      %v494 = vld [vmem:[%s3 + $0x30] sm:$0xf]
      %v495 = vld [vmem:[%s3 + $0x34] sm:$0xf]
      %v496 = vld [vmem:[%s3 + $0x38] sm:$0xf]
      %v497 = vld [vmem:[%s3 + $0x3c] sm:$0xf]
      %v498 = vld [vmem:[#allocation3 + $0x1] sm:$0xff]
      %v499 = vpack.c.bf16 %v498, %v498
      %s500 = scalar_lea.vmem %s3, 64
      %v501 = vld [vmem:[%s500] sm:$0xf]
      %v502 = vld [vmem:[%s500 + $0x4] sm:$0xf]
      %v503 = vld [vmem:[%s500 + $0x8] sm:$0xf]
      %v504 = vld [vmem:[%s500 + $0xc] sm:$0xf]
      %v505 = vld [vmem:[%s500 + $0x10] sm:$0xf]
      %v506 = vld [vmem:[%s500 + $0x14] sm:$0xf]
      %v507 = vld [vmem:[%s500 + $0x18] sm:$0xf]
      %v508 = vld [vmem:[%s500 + $0x1c] sm:$0xf]
      %v509 = vld [vmem:[%s500 + $0x20] sm:$0xf]
      %v510 = vld [vmem:[%s500 + $0x24] sm:$0xf]
      %v511 = vld [vmem:[%s500 + $0x28] sm:$0xf]
      %v512 = vld [vmem:[%s500 + $0x2c] sm:$0xf]
      %v513 = vld [vmem:[%s500 + $0x30] sm:$0xf]
      %v514 = vld [vmem:[%s500 + $0x34] sm:$0xf]
      %v515 = vld [vmem:[%s500 + $0x38] sm:$0xf]
      %v516 = vld [vmem:[%s500 + $0x3c] sm:$0xf]
      %v533 = vunpack.c.l.b16 %v501
      %v534 = vunpack.c.l.b16 %v502
      %v535 = vunpack.c.l.b16 %v503
      %v536 = vunpack.c.l.b16 %v504
      %v537 = vunpack.c.l.b16 %v505
      %v538 = vunpack.c.l.b16 %v506
      %v539 = vunpack.c.l.b16 %v507
      %v540 = vunpack.c.l.b16 %v508
      %v541 = vunpack.c.l.b16 %v509
      %v542 = vunpack.c.l.b16 %v510
      %v543 = vunpack.c.l.b16 %v511
      %v544 = vunpack.c.l.b16 %v512
      %v545 = vunpack.c.l.b16 %v513
      %v546 = vunpack.c.l.b16 %v514
      %v547 = vunpack.c.l.b16 %v515
      %v548 = vunpack.c.l.b16 %v516
      %v549 = vpack.c.b16 %v534, %v533
      %v550 = vpack.c.b16 %v536, %v535
      %v551 = vpack.c.b16 %v538, %v537
      %v552 = vpack.c.b16 %v540, %v539
      %v553 = vpack.c.b16 %v542, %v541
      %v554 = vpack.c.b16 %v544, %v543
      %v555 = vpack.c.b16 %v546, %v545
      %v556 = vpack.c.b16 %v548, %v547
      %565 = vmatprep.subr.bf16.mxu0 0
      %566 = vmatpush1.bf16.msra.mxu0 %v549
      %567 = vmatprep.subr.bf16.mxu0 0
      %568 = vmatpush1.bf16.msra.mxu0 %v550
      %569 = vmatprep.subr.bf16.mxu0 0
      %570 = vmatpush1.bf16.msra.mxu0 %v551
      %571 = vmatprep.subr.bf16.mxu0 0
      %572 = vmatpush1.bf16.msra.mxu0 %v552
      %573 = vmatprep.subr.bf16.mxu0 0
      %574 = vmatpush1.bf16.msra.mxu0 %v553
      %575 = vmatprep.subr.bf16.mxu0 0
      %576 = vmatpush1.bf16.msra.mxu0 %v554
      %577 = vmatprep.subr.bf16.mxu0 0
      %578 = vmatpush1.bf16.msra.mxu0 %v555
      %579 = vmatprep.subr.bf16.mxu0 0
      %580 = vmatpush1.bf16.msra.mxu0 %v556
      %581 = vmatprep.subr.bf16.mxu0 0
      %582 = vmatpush1.bf16.msra.mxu0 0
      %583 = vmatprep.subr.bf16.mxu0 0
      %584 = vmatpush1.bf16.msra.mxu0 0
      %585 = vmatprep.subr.bf16.mxu0 0
      %586 = vmatpush1.bf16.msra.mxu0 0
      %587 = vmatprep.subr.bf16.mxu0 0
      %588 = vmatpush1.bf16.msra.mxu0 0
      %589 = vmatprep.subr.bf16.mxu0 0
      %590 = vmatpush1.bf16.msra.mxu0 0
      %591 = vmatprep.subr.bf16.mxu0 0
      %592 = vmatpush1.bf16.msra.mxu0 0
      %593 = vmatprep.subr.bf16.mxu0 0
      %594 = vmatpush1.bf16.msra.mxu0 0
      %595 = vmatprep.subr.bf16.mxu0 0
      %596 = vmatpush1.bf16.msra.mxu0 0
      %597 = vmatprep.mubr.bf16.mxu0 0
      %598 = vmatmul.mubr.bf16.gmra.mrb[0].mxu0 %v499
      %v599 = vpop.f32.mrb[0].mxu0
      %v600 = vadd.f32 0.0, %v599
      %v601 = vpop.f32.mrb[0].mxu0
      %v602 = vpop.f32.mrb[0].mxu0
      %v603 = vpop.f32.mrb[0].mxu0
      %604 = vdwg.mxu0
      %v621 = vunpack.c.l.b16 %v482
      %v622 = vunpack.c.l.b16 %v483
      %v623 = vunpack.c.l.b16 %v484
      %v624 = vunpack.c.l.b16 %v485
      %v625 = vunpack.c.l.b16 %v486
      %v626 = vunpack.c.l.b16 %v487
      %v627 = vunpack.c.l.b16 %v488
      %v628 = vunpack.c.l.b16 %v489
      %v629 = vunpack.c.l.b16 %v490
      %v630 = vunpack.c.l.b16 %v491
      %v631 = vunpack.c.l.b16 %v492
      %v632 = vunpack.c.l.b16 %v493
      %v633 = vunpack.c.l.b16 %v494
      %v634 = vunpack.c.l.b16 %v495
      %v635 = vunpack.c.l.b16 %v496
      %v636 = vunpack.c.l.b16 %v497
      %v637 = vpack.c.b16 %v622, %v621
      %v638 = vpack.c.b16 %v624, %v623
      %v639 = vpack.c.b16 %v626, %v625
      %v640 = vpack.c.b16 %v628, %v627
      %v641 = vpack.c.b16 %v630, %v629
      %v642 = vpack.c.b16 %v632, %v631
      %v643 = vpack.c.b16 %v634, %v633
      %v644 = vpack.c.b16 %v636, %v635
      %653 = vmatprep.subr.bf16.mxu0 0
      %654 = vmatpush1.bf16.msra.mxu0 %v637
      %655 = vmatprep.subr.bf16.mxu0 0
      %656 = vmatpush1.bf16.msra.mxu0 %v638
      %657 = vmatprep.subr.bf16.mxu0 0
      %658 = vmatpush1.bf16.msra.mxu0 %v639
      %659 = vmatprep.subr.bf16.mxu0 0
      %660 = vmatpush1.bf16.msra.mxu0 %v640
      %661 = vmatprep.subr.bf16.mxu0 0
      %662 = vmatpush1.bf16.msra.mxu0 %v641
      %663 = vmatprep.subr.bf16.mxu0 0
      %664 = vmatpush1.bf16.msra.mxu0 %v642
      %665 = vmatprep.subr.bf16.mxu0 0
      %666 = vmatpush1.bf16.msra.mxu0 %v643
      %667 = vmatprep.subr.bf16.mxu0 0
      %668 = vmatpush1.bf16.msra.mxu0 %v644
      %669 = vmatprep.subr.bf16.mxu0 0
      %670 = vmatpush1.bf16.msra.mxu0 0
      %671 = vmatprep.subr.bf16.mxu0 0
      %672 = vmatpush1.bf16.msra.mxu0 0
      %673 = vmatprep.subr.bf16.mxu0 0
      %674 = vmatpush1.bf16.msra.mxu0 0
      %675 = vmatprep.subr.bf16.mxu0 0
      %676 = vmatpush1.bf16.msra.mxu0 0
      %677 = vmatprep.subr.bf16.mxu0 0
      %678 = vmatpush1.bf16.msra.mxu0 0
      %679 = vmatprep.subr.bf16.mxu0 0
      %680 = vmatpush1.bf16.msra.mxu0 0
      %681 = vmatprep.subr.bf16.mxu0 0
      %682 = vmatpush1.bf16.msra.mxu0 0
      %683 = vmatprep.subr.bf16.mxu0 0
      %684 = vmatpush1.bf16.msra.mxu0 0
      %685 = vmatprep.mubr.bf16.mxu0 0
      %686 = vmatmul.mubr.bf16.gmra.mrb[0].mxu0 %v481
      %v687 = vpop.f32.mrb[0].mxu0
      %v688 = vadd.f32 %v600, %v687
      %v689 = vpop.f32.mrb[0].mxu0
      %v690 = vpop.f32.mrb[0].mxu0
      %v691 = vpop.f32.mrb[0].mxu0
      %692 = vdwg.mxu0
      %v693 = vld [vmem:[#allocation3 + $0x2] sm:$0xff]
      %v694 = vpack.c.bf16 %v693, %v693
      %s695 = scalar_lea.vmem %s3, 128
      %v696 = vld [vmem:[%s695] sm:$0xf]
      %v697 = vld [vmem:[%s695 + $0x4] sm:$0xf]
      %v698 = vld [vmem:[%s695 + $0x8] sm:$0xf]
      %v699 = vld [vmem:[%s695 + $0xc] sm:$0xf]
      %v700 = vld [vmem:[%s695 + $0x10] sm:$0xf]
      %v701 = vld [vmem:[%s695 + $0x14] sm:$0xf]
      %v702 = vld [vmem:[%s695 + $0x18] sm:$0xf]
      %v703 = vld [vmem:[%s695 + $0x1c] sm:$0xf]
      %v704 = vld [vmem:[%s695 + $0x20] sm:$0xf]
      %v705 = vld [vmem:[%s695 + $0x24] sm:$0xf]
      %v706 = vld [vmem:[%s695 + $0x28] sm:$0xf]
      %v707 = vld [vmem:[%s695 + $0x2c] sm:$0xf]
      %v708 = vld [vmem:[%s695 + $0x30] sm:$0xf]
      %v709 = vld [vmem:[%s695 + $0x34] sm:$0xf]
      %v710 = vld [vmem:[%s695 + $0x38] sm:$0xf]
      %v711 = vld [vmem:[%s695 + $0x3c] sm:$0xf]
      %v728 = vunpack.c.l.b16 %v696
      %v729 = vunpack.c.l.b16 %v697
      %v730 = vunpack.c.l.b16 %v698
      %v731 = vunpack.c.l.b16 %v699
      %v732 = vunpack.c.l.b16 %v700
      %v733 = vunpack.c.l.b16 %v701
      %v734 = vunpack.c.l.b16 %v702
      %v735 = vunpack.c.l.b16 %v703
      %v736 = vunpack.c.l.b16 %v704
      %v737 = vunpack.c.l.b16 %v705
      %v738 = vunpack.c.l.b16 %v706
      %v739 = vunpack.c.l.b16 %v707
      %v740 = vunpack.c.l.b16 %v708
      %v741 = vunpack.c.l.b16 %v709
      %v742 = vunpack.c.l.b16 %v710
      %v743 = vunpack.c.l.b16 %v711
      %v744 = vpack.c.b16 %v729, %v728
      %v745 = vpack.c.b16 %v731, %v730
      %v746 = vpack.c.b16 %v733, %v732
      %v747 = vpack.c.b16 %v735, %v734
      %v748 = vpack.c.b16 %v737, %v736
      %v749 = vpack.c.b16 %v739, %v738
      %v750 = vpack.c.b16 %v741, %v740
      %v751 = vpack.c.b16 %v743, %v742
      %760 = vmatprep.subr.bf16.mxu0 0
      %761 = vmatpush1.bf16.msra.mxu0 %v744
      %762 = vmatprep.subr.bf16.mxu0 0
      %763 = vmatpush1.bf16.msra.mxu0 %v745
      %764 = vmatprep.subr.bf16.mxu0 0
      %765 = vmatpush1.bf16.msra.mxu0 %v746
      %766 = vmatprep.subr.bf16.mxu0 0
      %767 = vmatpush1.bf16.msra.mxu0 %v747
      %768 = vmatprep.subr.bf16.mxu0 0
      %769 = vmatpush1.bf16.msra.mxu0 %v748
      %770 = vmatprep.subr.bf16.mxu0 0
      %771 = vmatpush1.bf16.msra.mxu0 %v749
      %772 = vmatprep.subr.bf16.mxu0 0
      %773 = vmatpush1.bf16.msra.mxu0 %v750
      %774 = vmatprep.subr.bf16.mxu0 0
      %775 = vmatpush1.bf16.msra.mxu0 %v751
      %776 = vmatprep.subr.bf16.mxu0 0
      %777 = vmatpush1.bf16.msra.mxu0 0
      %778 = vmatprep.subr.bf16.mxu0 0
      %779 = vmatpush1.bf16.msra.mxu0 0
      %780 = vmatprep.subr.bf16.mxu0 0
      %781 = vmatpush1.bf16.msra.mxu0 0
      %782 = vmatprep.subr.bf16.mxu0 0
      %783 = vmatpush1.bf16.msra.mxu0 0
      %784 = vmatprep.subr.bf16.mxu0 0
      %785 = vmatpush1.bf16.msra.mxu0 0
      %786 = vmatprep.subr.bf16.mxu0 0
      %787 = vmatpush1.bf16.msra.mxu0 0
      %788 = vmatprep.subr.bf16.mxu0 0
      %789 = vmatpush1.bf16.msra.mxu0 0
      %790 = vmatprep.subr.bf16.mxu0 0
      %791 = vmatpush1.bf16.msra.mxu0 0
      %792 = vmatprep.mubr.bf16.mxu0 0
      %793 = vmatmul.mubr.bf16.gmra.mrb[0].mxu0 %v694
      %v794 = vpop.f32.mrb[0].mxu0
      %v795 = vadd.f32 0.0, %v794
      %v796 = vpop.f32.mrb[0].mxu0
      %v797 = vpop.f32.mrb[0].mxu0
      %v798 = vpop.f32.mrb[0].mxu0
      %799 = vdwg.mxu0
      %v800 = vadd.f32 %v688, %v795
      %v801 = vld [vmem:[%s4] sm:$0x1]
      %v803 = vlaneseq
      %v804 = vshrl.u32 %v803, 7
      %v805 = vsub.s32 0, %v804
      %v806 = vrot.slane %v801, %v805
      %v808 = vadd.f32 %v800, %v806
      %v809 = vmax.f32 %v808, 0.0
      %v810 = vpack.c.bf16 %v809, %v809
      %v811 = vld [vmem:[%s5] sm:$0xf]
      %v812 = vld [vmem:[%s5 + $0x4] sm:$0xf]
      %v813 = vld [vmem:[%s5 + $0x8] sm:$0xf]
      %v814 = vld [vmem:[%s5 + $0xc] sm:$0xf]
      %v815 = vld [vmem:[%s5 + $0x10] sm:$0xf]
      %v816 = vld [vmem:[%s5 + $0x14] sm:$0xf]
      %v817 = vld [vmem:[%s5 + $0x18] sm:$0xf]
      %v818 = vld [vmem:[%s5 + $0x1c] sm:$0xf]
      %v819 = vld [vmem:[%s5 + $0x20] sm:$0xf]
      %v820 = vld [vmem:[%s5 + $0x24] sm:$0xf]
      %v821 = vld [vmem:[%s5 + $0x28] sm:$0xf]
      %v822 = vld [vmem:[%s5 + $0x2c] sm:$0xf]
      %v823 = vld [vmem:[%s5 + $0x30] sm:$0xf]
      %v824 = vld [vmem:[%s5 + $0x34] sm:$0xf]
      %v825 = vld [vmem:[%s5 + $0x38] sm:$0xf]
      %v826 = vld [vmem:[%s5 + $0x3c] sm:$0xf]
      %v827 = vld [vmem:[%s6] sm:$0x1]
      %v829 = vlaneseq
      %v830 = vshrl.u32 %v829, 7
      %v831 = vsub.s32 0, %v830
      %v832 = vrot.slane %v827, %v831
      %v850 = vunpack.c.l.b16 %v811
      %v851 = vunpack.c.l.b16 %v812
      %v852 = vunpack.c.l.b16 %v813
      %v853 = vunpack.c.l.b16 %v814
      %v854 = vunpack.c.l.b16 %v815
      %v855 = vunpack.c.l.b16 %v816
      %v856 = vunpack.c.l.b16 %v817
      %v857 = vunpack.c.l.b16 %v818
      %v858 = vunpack.c.l.b16 %v819
      %v859 = vunpack.c.l.b16 %v820
      %v860 = vunpack.c.l.b16 %v821
      %v861 = vunpack.c.l.b16 %v822
      %v862 = vunpack.c.l.b16 %v823
      %v863 = vunpack.c.l.b16 %v824
      %v864 = vunpack.c.l.b16 %v825
      %v865 = vunpack.c.l.b16 %v826
      %v866 = vpack.c.b16 %v851, %v850
      %v867 = vpack.c.b16 %v853, %v852
      %v868 = vpack.c.b16 %v855, %v854
      %v869 = vpack.c.b16 %v857, %v856
      %v870 = vpack.c.b16 %v859, %v858
      %v871 = vpack.c.b16 %v861, %v860
      %v872 = vpack.c.b16 %v863, %v862
      %v873 = vpack.c.b16 %v865, %v864
      %882 = vmatprep.subr.bf16.mxu0 0
      %883 = vmatpush1.bf16.msra.mxu0 %v866
      %884 = vmatprep.subr.bf16.mxu0 0
      %885 = vmatpush1.bf16.msra.mxu0 %v867
      %886 = vmatprep.subr.bf16.mxu0 0
      %887 = vmatpush1.bf16.msra.mxu0 %v868
      %888 = vmatprep.subr.bf16.mxu0 0
      %889 = vmatpush1.bf16.msra.mxu0 %v869
      %890 = vmatprep.subr.bf16.mxu0 0
      %891 = vmatpush1.bf16.msra.mxu0 %v870
      %892 = vmatprep.subr.bf16.mxu0 0
      %893 = vmatpush1.bf16.msra.mxu0 %v871
      %894 = vmatprep.subr.bf16.mxu0 0
      %895 = vmatpush1.bf16.msra.mxu0 %v872
      %896 = vmatprep.subr.bf16.mxu0 0
      %897 = vmatpush1.bf16.msra.mxu0 %v873
      %898 = vmatprep.subr.bf16.mxu0 0
      %899 = vmatpush1.bf16.msra.mxu0 0
      %900 = vmatprep.subr.bf16.mxu0 0
      %901 = vmatpush1.bf16.msra.mxu0 0
      %902 = vmatprep.subr.bf16.mxu0 0
      %903 = vmatpush1.bf16.msra.mxu0 0
      %904 = vmatprep.subr.bf16.mxu0 0
      %905 = vmatpush1.bf16.msra.mxu0 0
      %906 = vmatprep.subr.bf16.mxu0 0
      %907 = vmatpush1.bf16.msra.mxu0 0
      %908 = vmatprep.subr.bf16.mxu0 0
      %909 = vmatpush1.bf16.msra.mxu0 0
      %910 = vmatprep.subr.bf16.mxu0 0
      %911 = vmatpush1.bf16.msra.mxu0 0
      %912 = vmatprep.subr.bf16.mxu0 0
      %913 = vmatpush1.bf16.msra.mxu0 0
      %914 = vmatprep.mubr.bf16.mxu0 0
      %915 = vmatmul.mubr.bf16.gmra.mrb[0].mxu0 %v810
      %v916 = vpop.f32.mrb[0].mxu0
      %v917 = vadd.f32 %v832, %v916
      %v918 = vpop.f32.mrb[0].mxu0
      %v919 = vpop.f32.mrb[0].mxu0
      %v920 = vpop.f32.mrb[0].mxu0
      %921 = vdwg.mxu0
      %vm922 = vcmask 64512
      %923 = vst.msk [vmem:[%s273] sm:$0xff] %vm922, %v917
      %p924 = scmp.lt.s32.totalorder %s18, 3
      %s925 = scalar_select %p924, %s18, 3
      %s926 = smul.addr %s925, 8
      %s927 = scalar_lea.vmem %s7, %s926
      // Predicated region
      $region49: #{spec2dcnn_2day_v2_forward.4} parent=47 // pred_check
        %p928 = pneg %p188
      $region50: #{spec2dcnn_2day_v2_forward.4} parent=47 // pred_check_branch
        %930 = sbr.rel (%p928) target = $region52
      $region51: #{spec2dcnn_2day_v2_forward.4} parent=47 // pred_region
        _
      $region52: #{spec2dcnn_2day_v2_forward.4} parent=47 // pred_fallthru
        _
    $region48: #{spec2dcnn_2day_v2_forward.4} parent=5 // pred_fallthru
      _
    %p931 = scmp.le.s32.totalorder 2, %s13
    // Predicated region
    $region53: #{spec2dcnn_2day_v2_forward.4} parent=5 // pred_check
      %p932 = pneg %p931
    $region54: #{spec2dcnn_2day_v2_forward.4} parent=5 // pred_check_branch
      %934 = sbr.rel (%p932) target = $region56
    $region55: #{spec2dcnn_2day_v2_forward.4} parent=5 // pred_region
      %s935 = ssub.s32 %s13, 2
      // Predicated region
      $region57: #{spec2dcnn_2day_v2_forward.4} parent=55 // pred_check
        %p936 = pneg %p194
      $region58: #{spec2dcnn_2day_v2_forward.4} parent=55 // pred_check_branch
        %938 = sbr.rel (%p936) target = $region60
      $region59: #{spec2dcnn_2day_v2_forward.4} parent=55 // pred_region
        %p939 = scmp.lt.s32.totalorder %s19, 3
        %s940 = scalar_select %p939, %s19, 3
        %s941 = smul.addr %s940, 8
        %s942 = scalar_lea.vmem %s7, %s941
      $region60: #{spec2dcnn_2day_v2_forward.4} parent=55 // pred_fallthru
        _
    $region56: #{spec2dcnn_2day_v2_forward.4} parent=5 // pred_fallthru
      _
  $region6: #{spec2dcnn_2day_v2_forward.4} parent=0 // loop_footer
    %s17 = sadd.s32 1, %s13
  $region7: #{spec2dcnn_2day_v2_forward.4} parent=0 // loop_footer_branch
    %12 = sbr.rel target = $region3
  $region8: #{spec2dcnn_2day_v2_forward.4} parent=0 // loop_exit
    _

</llo_original>
